<compile_context>
chip_gen: v5e
topology: v5e:2x2
jax: 0.10.0
libtpu: 0.0.40
codegen_flags: <defaults>
</compile_context>

<pallas_src>
import functools

import jax
import jax.numpy as jnp
from jax.experimental import pallas as pl
from jax.experimental.pallas import tpu as pltpu

LANE = 128
SUBLANE = 8


def _round_up(n: int, m: int) -> int:
    return ((n + m - 1) // m) * m


def _tensorcores_per_chip() -> int:
    """2 TensorCores per chip on v7x, 1 on v5e/v6e. Safe fallback: 1."""
    try:
        kind = jax.devices()[0].device_kind.lower()
        if "v7" in kind or "7x" in kind:
            return 2
    except Exception:
        pass
    return 1


def vae_kernel(x_ref,
               w1_ref, b1_ref,
               wml_ref, bml_ref,
               w3_ref, b3_ref,
               w4_ref, b4_ref,
               recon_ref, mulv_ref,
               *, zp: int):
    # ---- Encoder ----
    x = x_ref[...].astype(jnp.bfloat16)                               # [TB, D]
    h = jnp.dot(x, w1_ref[...], preferred_element_type=jnp.float32) + b1_ref[...]
    h = jnp.maximum(h, 0.0)                                           # f32 ReLU (VPU)

    # Fused mu || log_var head: one [Hp, 2*Zp] matmul; stored as a single output.
    mulv = jnp.dot(h.astype(jnp.bfloat16), wml_ref[...],
                   preferred_element_type=jnp.float32) + bml_ref[...]
    mulv_ref[...] = mulv                                              # [TB, 2*Zp] f32

    # ---- Reparameterize (eval mode): z = mu ----
    z = mulv[:, :zp].astype(jnp.bfloat16)                             # [TB, Zp]

    # ---- Decoder ----
    h2 = jnp.dot(z, w3_ref[...], preferred_element_type=jnp.float32) + b3_ref[...]
    h2 = jnp.maximum(h2, 0.0)
    logits = jnp.dot(h2.astype(jnp.bfloat16), w4_ref[...],
                     preferred_element_type=jnp.float32) + b4_ref[...]
    # sigmoid = 1 / (1 + exp(-x)): exp on EUP, approx reciprocal (off the VALU slot)
    recon = pl.reciprocal(1.0 + jnp.exp(-logits), approx=True)
    recon_ref[...] = recon.astype(jnp.bfloat16)                       # bf16 writeback


def vae_forward(x, params, *, max_tb: int = 1024, num_cores: int | None = None):
    """x: [B, d_in] float32. Returns (recon [B, d_in], mu [B, Z], log_var [B, Z])."""
    B, D = x.shape
    Z = params["latent"]
    Dp, Hp, Zp = params["Dp"], params["Hp"], params["Zp"]
    if num_cores is None:
        num_cores = _tensorcores_per_chip()

    # Pad batch only to the 8-row sublane granule.
    Bp = _round_up(max(B, SUBLANE), SUBLANE)
    # One grid step per TensorCore; more steps only if a step would exceed max_tb.
    num_steps = max(num_cores, -(-Bp // max_tb))
    if num_cores > 1:
        num_steps = _round_up(num_steps, num_cores)   # balanced megacore split
    tb = _round_up(-(-Bp // num_steps), SUBLANE)
    Bp = tb * num_steps
    grid = (num_steps,)

    # Only a tiny batch-row zero pad (no feature-lane pad, no host-side cast).
    x_p = x if Bp == B else jnp.pad(x, ((0, Bp - B), (0, 0)))

    weight_args = (
        params["w1"], params["b1"],
        params["w_mulv"], params["b_mulv"],
        params["w3"], params["b3"],
        params["w4"], params["b4"],
    )

    in_specs = [
        pl.BlockSpec((tb, D), lambda i: (i, 0)),           # activations: tiled over batch
        # weights/biases: constant index_map -> VMEM-resident, fetched once
        pl.BlockSpec((D, Hp), lambda i: (0, 0)),
        pl.BlockSpec((1, Hp), lambda i: (0, 0)),
        pl.BlockSpec((Hp, 2 * Zp), lambda i: (0, 0)),
        pl.BlockSpec((1, 2 * Zp), lambda i: (0, 0)),
        pl.BlockSpec((Zp, Hp), lambda i: (0, 0)),
        pl.BlockSpec((1, Hp), lambda i: (0, 0)),
        pl.BlockSpec((Hp, Dp), lambda i: (0, 0)),
        pl.BlockSpec((1, Dp), lambda i: (0, 0)),
    ]
    out_specs = (
        pl.BlockSpec((tb, Dp), lambda i: (i, 0)),          # recon (bf16)
        pl.BlockSpec((tb, 2 * Zp), lambda i: (i, 0)),      # fused mu||log_var (f32)
    )
    out_shape = (
        jax.ShapeDtypeStruct((Bp, Dp), jnp.bfloat16),
        jax.ShapeDtypeStruct((Bp, 2 * Zp), jnp.float32),
    )

    flops = 2 * Bp * (D * Hp + Hp * 2 * Zp + Zp * Hp + Hp * Dp)
    weight_bytes = sum(int(w.size) * w.dtype.itemsize for w in weight_args)
    bytes_accessed = (int(x_p.size) * 4                 # f32 activations in
                      + weight_bytes                    # resident weights
                      + Bp * Dp * 2                     # bf16 recon out
                      + Bp * 2 * Zp * 4)                # f32 mu||log_var out
    cost = pl.CostEstimate(flops=flops,
                           transcendentals=Bp * Dp,     # sigmoid exp
                           bytes_accessed=bytes_accessed)

    recon_p, mulv_p = pl.pallas_call(
        functools.partial(vae_kernel, zp=Zp),
        grid_spec=pltpu.PrefetchScalarGridSpec(
            num_scalar_prefetch=0,
            grid=grid,
            in_specs=in_specs,
            out_specs=out_specs,
        ),
        out_shape=out_shape,
        compiler_params=pltpu.CompilerParams(
            dimension_semantics=("parallel",),          # megacore sharding on v7x
            vmem_limit_bytes=32 * 1024 * 1024,          # safe on v5e/v6e/v7x
        ),
        cost_estimate=cost,
    )(x_p, *weight_args)

    # Slice lane/batch padding off; split the fused mu||log_var stream.
    recon = recon_p[:B, :D].astype(jnp.float32)
    mu = mulv_p[:B, :Z]
    log_var = mulv_p[:B, Zp:Zp + Z]
    return recon, mu, log_var


def init_params(key, d_in, hidden, latent):
    """Weights pre-padded on lane dims to 128 multiples (zero-filled), bf16 for the MXU."""
    Dp = _round_up(d_in, LANE)
    Hp = _round_up(hidden, LANE)
    Zp = _round_up(latent, LANE)
    ks = jax.random.split(key, 10)
    scale = 0.1

    def pad_w(k, rows, cols, rp, cp):
        w = scale * jax.random.normal(k, (rows, cols), jnp.float32)
        return jnp.zeros((rp, cp), jnp.float32).at[:rows, :cols].set(w)

    def pad_b(k, cols, cp):
        b = scale * jax.random.normal(k, (1, cols), jnp.float32)
        return jnp.zeros((1, cp), jnp.float32).at[:, :cols].set(b)

    w1 = pad_w(ks[0], d_in, hidden, d_in, Hp)            # K dim kept at d_in (no pad)
    w_mu = pad_w(ks[1], hidden, latent, Hp, Zp)
    w_lv = pad_w(ks[2], hidden, latent, Hp, Zp)
    w3 = pad_w(ks[3], latent, hidden, Zp, Hp)
    w4 = pad_w(ks[4], hidden, d_in, Hp, Dp)
    b_mulv = jnp.concatenate([pad_b(ks[6], latent, Zp), pad_b(ks[7], latent, Zp)], axis=1)

    return {
        "w1": w1.astype(jnp.bfloat16),                                        # [d_in, Hp]
        "b1": pad_b(ks[5], hidden, Hp),
        "w_mulv": jnp.concatenate([w_mu, w_lv], axis=1).astype(jnp.bfloat16), # [Hp, 2*Zp]
        "b_mulv": b_mulv,                                                     # [1, 2*Zp]
        "w3": w3.astype(jnp.bfloat16),
        "b3": pad_b(ks[8], hidden, Hp),
        "w4": w4.astype(jnp.bfloat16),
        "b4": pad_b(ks[9], d_in, Dp),
        "d_in": d_in, "hidden": hidden, "latent": latent,
        "Dp": Dp, "Hp": Hp, "Zp": Zp,
    }


def vae_ref(x, p):
    """Plain-JAX reference mirroring the kernel's bf16-MXU / f32-elementwise math."""
    D, Z, Zp = p["d_in"], p["latent"], p["Zp"]
    xb = x.astype(jnp.bfloat16)
    h = jnp.maximum(jnp.dot(xb, p["w1"], preferred_element_type=jnp.float32) + p["b1"], 0.0)
    mulv = jnp.dot(h.astype(jnp.bfloat16), p["w_mulv"],
                   preferred_element_type=jnp.float32) + p["b_mulv"]
    mu, lv = mulv[:, :Zp], mulv[:, Zp:]
    z = mu.astype(jnp.bfloat16)
    h2 = jnp.maximum(jnp.dot(z, p["w3"], preferred_element_type=jnp.float32) + p["b3"], 0.0)
    recon = jax.nn.sigmoid(jnp.dot(h2.astype(jnp.bfloat16), p["w4"],
                                   preferred_element_type=jnp.float32) + p["b4"])
    return recon[:, :D], mu[:, :Z], lv[:, :Z]


if __name__ == "__main__":
    key = jax.random.PRNGKey(0)
    k_x, k_p = jax.random.split(key)

    # Logical module dims (d_in=32, hidden=64, latent=16); batch of 300 exercises
    # the sublane-granule batch padding (300 -> 304) and the per-TC grid split.
    B, D, H, Z = 300, 32, 64, 16
    x = jax.random.normal(k_x, (B, D), jnp.float32)
    params = init_params(k_p, D, H, Z)

    recon, mu, log_var = vae_forward(x, params)
    jax.block_until_ready((recon, mu, log_var))

    assert recon.shape == (B, D) and mu.shape == (B, Z) and log_var.shape == (B, Z)

    r_ref, mu_r, lv_r = vae_ref(x, params)
    assert jnp.allclose(recon, r_ref, atol=1e-2, rtol=1e-2), "recon mismatch"
    assert jnp.allclose(mu, mu_r, atol=1e-2, rtol=1e-2), "mu mismatch"
    assert jnp.allclose(log_var, lv_r, atol=1e-2, rtol=1e-2), "log_var mismatch"

    print("KERNEL_OK")
</pallas_src>

<mosaic_0001>
module attributes {stable_mosaic.version = 11 : i64} {
  func.func @vae_kernel(%arg0: i32, %arg1: memref<304x32xf32, #tpu.memory_space<vmem>>, %arg2: memref<32x128xbf16, #tpu.memory_space<vmem>>, %arg3: memref<1x128xf32, #tpu.memory_space<vmem>>, %arg4: memref<128x256xbf16, #tpu.memory_space<vmem>>, %arg5: memref<1x256xf32, #tpu.memory_space<vmem>>, %arg6: memref<128x128xbf16, #tpu.memory_space<vmem>>, %arg7: memref<1x128xf32, #tpu.memory_space<vmem>>, %arg8: memref<128x128xbf16, #tpu.memory_space<vmem>>, %arg9: memref<1x128xf32, #tpu.memory_space<vmem>>, %arg10: memref<304x128xbf16, #tpu.memory_space<vmem>>, %arg11: memref<304x256xf32, #tpu.memory_space<vmem>>) attributes {dimension_semantics = [#tpu.dimension_semantics<parallel>], iteration_bounds = array<i64: 1>, scalar_prefetch = 0 : i64, scratch_operands = 0 : i64, tpu.core_type = #tpu.core_type<tc>, window_params = [{transform_indices = @transform_0, window_bounds = array<i64: 304, 32>}, {pipeline_mode = #tpu.pipeline_mode<synchronous>, transform_indices = @transform_1, window_bounds = array<i64: 32, 128>}, {pipeline_mode = #tpu.pipeline_mode<synchronous>, transform_indices = @transform_2, window_bounds = array<i64: 1, 128>}, {pipeline_mode = #tpu.pipeline_mode<synchronous>, transform_indices = @transform_3, window_bounds = array<i64: 128, 256>}, {pipeline_mode = #tpu.pipeline_mode<synchronous>, transform_indices = @transform_4, window_bounds = array<i64: 1, 256>}, {pipeline_mode = #tpu.pipeline_mode<synchronous>, transform_indices = @transform_5, window_bounds = array<i64: 128, 128>}, {pipeline_mode = #tpu.pipeline_mode<synchronous>, transform_indices = @transform_6, window_bounds = array<i64: 1, 128>}, {pipeline_mode = #tpu.pipeline_mode<synchronous>, transform_indices = @transform_7, window_bounds = array<i64: 128, 128>}, {pipeline_mode = #tpu.pipeline_mode<synchronous>, transform_indices = @transform_8, window_bounds = array<i64: 1, 128>}, {transform_indices = @transform_9, window_bounds = array<i64: 304, 128>}, {transform_indices = @transform_10, window_bounds = array<i64: 304, 256>}]} {
    %c0 = arith.constant 0 : index
    %c0_0 = arith.constant 0 : index
    %0 = vector.load %arg1[%c0, %c0_0] : memref<304x32xf32, #tpu.memory_space<vmem>>, vector<304x32xf32>
    %1 = arith.truncf %0 : vector<304x32xf32> to vector<304x32xbf16>
    %c0_1 = arith.constant 0 : index
    %c0_2 = arith.constant 0 : index
    %2 = vector.load %arg2[%c0_1, %c0_2] : memref<32x128xbf16, #tpu.memory_space<vmem>>, vector<32x128xbf16>
    %cst = arith.constant dense<0.000000e+00> : vector<304x128xf32>
    %3 = tpu.matmul %1, %2, %cst {dimension_numbers = #tpu.dot_dimension_numbers<[1], [0], [0], [1], [0, 0, 1, 1], [], []>} : vector<304x32xbf16>, vector<32x128xbf16>, vector<304x128xf32> -> vector<304x128xf32>
    %c0_3 = arith.constant 0 : index
    %c0_4 = arith.constant 0 : index
    %4 = vector.load %arg3[%c0_3, %c0_4] : memref<1x128xf32, #tpu.memory_space<vmem>>, vector<1x128xf32>
    %5 = vector.broadcast %4 : vector<1x128xf32> to vector<304x128xf32>
    %6 = arith.addf %3, %5 : vector<304x128xf32>
    %cst_5 = arith.constant 0.000000e+00 : f32
    %7 = vector.broadcast %cst_5 : f32 to vector<304x128xf32>
    %8 = arith.maximumf %6, %7 : vector<304x128xf32>
    %9 = arith.truncf %8 : vector<304x128xf32> to vector<304x128xbf16>
    %c0_6 = arith.constant 0 : index
    %c0_7 = arith.constant 0 : index
    %10 = vector.load %arg4[%c0_6, %c0_7] : memref<128x256xbf16, #tpu.memory_space<vmem>>, vector<128x256xbf16>
    %cst_8 = arith.constant dense<0.000000e+00> : vector<304x256xf32>
    %11 = tpu.matmul %9, %10, %cst_8 {dimension_numbers = #tpu.dot_dimension_numbers<[1], [0], [0], [1], [0, 0, 1, 1], [], []>} : vector<304x128xbf16>, vector<128x256xbf16>, vector<304x256xf32> -> vector<304x256xf32>
    %c0_9 = arith.constant 0 : index
    %c0_10 = arith.constant 0 : index
    %12 = vector.load %arg5[%c0_9, %c0_10] : memref<1x256xf32, #tpu.memory_space<vmem>>, vector<1x256xf32>
    %13 = vector.broadcast %12 : vector<1x256xf32> to vector<304x256xf32>
    %14 = arith.addf %11, %13 : vector<304x256xf32>
    %c0_11 = arith.constant 0 : index
    %c0_12 = arith.constant 0 : index
    %15 = vector.load %arg11[%c0_11, %c0_12] : memref<304x256xf32, #tpu.memory_space<vmem>>, vector<304x256xf32>
    tpu.vector_store %arg11[%c0_11, %c0_12], %14 {strides = array<i32>} : memref<304x256xf32, #tpu.memory_space<vmem>>, vector<304x256xf32>,
    %16 = vector.extract_strided_slice %14 {offsets = [0, 0], sizes = [304, 128], strides = [1, 1]} : vector<304x256xf32> to vector<304x128xf32>
    %17 = arith.truncf %16 : vector<304x128xf32> to vector<304x128xbf16>
    %c0_13 = arith.constant 0 : index
    %c0_14 = arith.constant 0 : index
    %18 = vector.load %arg6[%c0_13, %c0_14] : memref<128x128xbf16, #tpu.memory_space<vmem>>, vector<128x128xbf16>
    %cst_15 = arith.constant dense<0.000000e+00> : vector<304x128xf32>
    %19 = tpu.matmul %17, %18, %cst_15 {dimension_numbers = #tpu.dot_dimension_numbers<[1], [0], [0], [1], [0, 0, 1, 1], [], []>} : vector<304x128xbf16>, vector<128x128xbf16>, vector<304x128xf32> -> vector<304x128xf32>
    %c0_16 = arith.constant 0 : index
    %c0_17 = arith.constant 0 : index
    %20 = vector.load %arg7[%c0_16, %c0_17] : memref<1x128xf32, #tpu.memory_space<vmem>>, vector<1x128xf32>
    %21 = vector.broadcast %20 : vector<1x128xf32> to vector<304x128xf32>
    %22 = arith.addf %19, %21 : vector<304x128xf32>
    %cst_18 = arith.constant 0.000000e+00 : f32
    %23 = vector.broadcast %cst_18 : f32 to vector<304x128xf32>
    %24 = arith.maximumf %22, %23 : vector<304x128xf32>
    %25 = arith.truncf %24 : vector<304x128xf32> to vector<304x128xbf16>
    %c0_19 = arith.constant 0 : index
    %c0_20 = arith.constant 0 : index
    %26 = vector.load %arg8[%c0_19, %c0_20] : memref<128x128xbf16, #tpu.memory_space<vmem>>, vector<128x128xbf16>
    %cst_21 = arith.constant dense<0.000000e+00> : vector<304x128xf32>
    %27 = tpu.matmul %25, %26, %cst_21 {dimension_numbers = #tpu.dot_dimension_numbers<[1], [0], [0], [1], [0, 0, 1, 1], [], []>} : vector<304x128xbf16>, vector<128x128xbf16>, vector<304x128xf32> -> vector<304x128xf32>
    %c0_22 = arith.constant 0 : index
    %c0_23 = arith.constant 0 : index
    %28 = vector.load %arg9[%c0_22, %c0_23] : memref<1x128xf32, #tpu.memory_space<vmem>>, vector<1x128xf32>
    %29 = vector.broadcast %28 : vector<1x128xf32> to vector<304x128xf32>
    %30 = arith.addf %27, %29 : vector<304x128xf32>
    %cst_24 = arith.constant 0.000000e+00 : f32
    %31 = vector.broadcast %cst_24 : f32 to vector<304x128xf32>
    %32 = arith.subf %31, %30 : vector<304x128xf32>
    %33 = math.exp %32 : vector<304x128xf32>
    %cst_25 = arith.constant 1.000000e+00 : f32
    %34 = vector.broadcast %cst_25 : f32 to vector<304x128xf32>
    %35 = arith.addf %34, %33 : vector<304x128xf32>
    %36 = tpu.reciprocal %35 {approx = true} : vector<304x128xf32> -> vector<304x128xf32>
    %37 = arith.truncf %36 : vector<304x128xf32> to vector<304x128xbf16>
    %c0_26 = arith.constant 0 : index
    %c0_27 = arith.constant 0 : index
    %38 = vector.load %arg10[%c0_26, %c0_27] : memref<304x128xbf16, #tpu.memory_space<vmem>>, vector<304x128xbf16>
    tpu.vector_store %arg10[%c0_26, %c0_27], %37 {strides = array<i32>} : memref<304x128xbf16, #tpu.memory_space<vmem>>, vector<304x128xbf16>,
    return
  }
  func.func @transform_0(%arg0: i32) -> (i32, i32) {
    %c0_i32 = arith.constant 0 : i32
    %c0_i32_0 = arith.constant 0 : i32
    return %arg0, %c0_i32 : i32, i32
  }
  func.func @transform_1(%arg0: i32) -> (i32, i32) {
    %c0_i32 = arith.constant 0 : i32
    %c0_i32_0 = arith.constant 0 : i32
    %c0_i32_1 = arith.constant 0 : i32
    return %c0_i32, %c0_i32_0 : i32, i32
  }
  func.func @transform_2(%arg0: i32) -> (i32, i32) {
    %c0_i32 = arith.constant 0 : i32
    %c0_i32_0 = arith.constant 0 : i32
    %c0_i32_1 = arith.constant 0 : i32
    return %c0_i32, %c0_i32_0 : i32, i32
  }
  func.func @transform_3(%arg0: i32) -> (i32, i32) {
    %c0_i32 = arith.constant 0 : i32
    %c0_i32_0 = arith.constant 0 : i32
    %c0_i32_1 = arith.constant 0 : i32
    return %c0_i32, %c0_i32_0 : i32, i32
  }
  func.func @transform_4(%arg0: i32) -> (i32, i32) {
    %c0_i32 = arith.constant 0 : i32
    %c0_i32_0 = arith.constant 0 : i32
    %c0_i32_1 = arith.constant 0 : i32
    return %c0_i32, %c0_i32_0 : i32, i32
  }
  func.func @transform_5(%arg0: i32) -> (i32, i32) {
    %c0_i32 = arith.constant 0 : i32
    %c0_i32_0 = arith.constant 0 : i32
    %c0_i32_1 = arith.constant 0 : i32
    return %c0_i32, %c0_i32_0 : i32, i32
  }
  func.func @transform_6(%arg0: i32) -> (i32, i32) {
    %c0_i32 = arith.constant 0 : i32
    %c0_i32_0 = arith.constant 0 : i32
    %c0_i32_1 = arith.constant 0 : i32
    return %c0_i32, %c0_i32_0 : i32, i32
  }
  func.func @transform_7(%arg0: i32) -> (i32, i32) {
    %c0_i32 = arith.constant 0 : i32
    %c0_i32_0 = arith.constant 0 : i32
    %c0_i32_1 = arith.constant 0 : i32
    return %c0_i32, %c0_i32_0 : i32, i32
  }
  func.func @transform_8(%arg0: i32) -> (i32, i32) {
    %c0_i32 = arith.constant 0 : i32
    %c0_i32_0 = arith.constant 0 : i32
    %c0_i32_1 = arith.constant 0 : i32
    return %c0_i32, %c0_i32_0 : i32, i32
  }
  func.func @transform_9(%arg0: i32) -> (i32, i32) {
    %c0_i32 = arith.constant 0 : i32
    %c0_i32_0 = arith.constant 0 : i32
    return %arg0, %c0_i32 : i32, i32
  }
  func.func @transform_10(%arg0: i32) -> (i32, i32) {
    %c0_i32 = arith.constant 0 : i32
    %c0_i32_0 = arith.constant 0 : i32
    return %arg0, %c0_i32 : i32, i32
  }
}

</mosaic_0001>

<llo_original>
// kernel: tpu_custom_call.1
$region0: #{tpu_custom_call.1}
  #allocation0 [shape = 'u32[]', space=smem, size = 0x4, offset = 0x4, fixed_abs, tag = 'smem constant byte address 0x4 - core index']
  #allocation1 [shape = 'u32[72,128]{1,0:T(1,128)}', space=vmem, size = 0x9000, scoped, tag = 'internal scratch']
  %s0 = inlined_call_operand.vmem [shape: f32[304,32], index: 0, kind: input, shape index: {}]
  %s1 = inlined_call_operand.vmem [shape: bf16[32,128], index: 1, kind: input, shape index: {}]
  %s2 = inlined_call_operand.vmem [shape: f32[1,128], index: 2, kind: input, shape index: {}]
  %s3 = inlined_call_operand.vmem [shape: bf16[128,256], index: 3, kind: input, shape index: {}]
  %s4 = inlined_call_operand.vmem [shape: f32[1,256], index: 4, kind: input, shape index: {}]
  %s5 = inlined_call_operand.vmem [shape: bf16[128,128], index: 5, kind: input, shape index: {}]
  %s6 = inlined_call_operand.vmem [shape: f32[1,128], index: 6, kind: input, shape index: {}]
  %s7 = inlined_call_operand.vmem [shape: bf16[128,128], index: 7, kind: input, shape index: {}]
  %s8 = inlined_call_operand.vmem [shape: f32[1,128], index: 8, kind: input, shape index: {}]
  %s9 = inlined_call_operand.hbm [shape: bf16[304,128], index: 9, kind: output, shape index: {0}]
  %s10 = inlined_call_operand.hbm [shape: f32[304,256], index: 10, kind: output, shape index: {1}]
  %11 = xla_tuple %s9, %s10
  %s12 = sld [smem:[#allocation0]]
  $region54: #{tpu_custom_call.1} parent=0
    _
  %s14 = ssub.s32 1, %s12
  %s15 = scalar_select 0, %s14, %s12
  $region1: #{tpu_custom_call.1} parent=0
    #allocation2 [shape = 'u8[77824]{0}', space=vmem, size = 0x13000, scoped, tag = 'output window, operand 0, single buffered']
    #allocation3 [shape = 's32[1]{0}', space=sflag, size = 0x4, scoped, tag = 'scoped memory for tpu_custom_call.1']
    #allocation4 [shape = 'u8[311296]{0}', space=vmem, size = 0x4c000, scoped, tag = 'output window, operand 1, single buffered']
    #allocation5 [shape = 's32[1]{0}', space=sflag, size = 0x4, scoped, tag = 'scoped memory for tpu_custom_call.1']
    %16 = vsyncpa [#allocation3], 0
    %17 = vsyncpa [#allocation5], 0
    // Predicated region
    $region2: #{tpu_custom_call.1} parent=1 // pred_check
      _
    $region3: #{tpu_custom_call.1} parent=1 // pred_check_branch
      %19 = sbr.rel (0) target = $region5
    $region4: #{tpu_custom_call.1} parent=1 // pred_region
      _
    $region5: #{tpu_custom_call.1} parent=1 // pred_fallthru
      _
    // Predicated region
    $region6: #{tpu_custom_call.1} parent=1 // pred_check
      _
    $region7: #{tpu_custom_call.1} parent=1 // pred_check_branch
      %21 = sbr.rel (0) target = $region9
    $region8: #{tpu_custom_call.1} parent=1 // pred_region
      _
    $region9: #{tpu_custom_call.1} parent=1 // pred_fallthru
      _
    // Predicated region
    $region10: #{tpu_custom_call.1} parent=1 // pred_check
      _
    $region11: #{tpu_custom_call.1} parent=1 // pred_check_branch
      %23 = sbr.rel (0) target = $region13
    $region12: #{tpu_custom_call.1} parent=1 // pred_region
      _
    $region13: #{tpu_custom_call.1} parent=1 // pred_fallthru
      _
    // Predicated region
    $region14: #{tpu_custom_call.1} parent=1 // pred_check
      _
    $region15: #{tpu_custom_call.1} parent=1 // pred_check_branch
      %25 = sbr.rel (0) target = $region17
    $region16: #{tpu_custom_call.1} parent=1 // pred_region
      _
    $region17: #{tpu_custom_call.1} parent=1 // pred_fallthru
      _
    // Predicated region
    $region18: #{tpu_custom_call.1} parent=1 // pred_check
      _
    $region19: #{tpu_custom_call.1} parent=1 // pred_check_branch
      %27 = sbr.rel (0) target = $region21
    $region20: #{tpu_custom_call.1} parent=1 // pred_region
      _
    $region21: #{tpu_custom_call.1} parent=1 // pred_fallthru
      _
    // Predicated region
    $region22: #{tpu_custom_call.1} parent=1 // pred_check
      _
    $region23: #{tpu_custom_call.1} parent=1 // pred_check_branch
      %29 = sbr.rel (0) target = $region25
    $region24: #{tpu_custom_call.1} parent=1 // pred_region
      _
    $region25: #{tpu_custom_call.1} parent=1 // pred_fallthru
      _
    // Predicated region
    $region26: #{tpu_custom_call.1} parent=1 // pred_check
      _
    $region27: #{tpu_custom_call.1} parent=1 // pred_check_branch
      %31 = sbr.rel (0) target = $region29
    $region28: #{tpu_custom_call.1} parent=1 // pred_region
      _
    $region29: #{tpu_custom_call.1} parent=1 // pred_fallthru
      _
    // Predicated region
    $region30: #{tpu_custom_call.1} parent=1 // pred_check
      _
    $region31: #{tpu_custom_call.1} parent=1 // pred_check_branch
      %33 = sbr.rel (0) target = $region33
    $region32: #{tpu_custom_call.1} parent=1 // pred_region
      _
    $region33: #{tpu_custom_call.1} parent=1 // pred_fallthru
      _
    // Predicated region
    $region34: #{tpu_custom_call.1} parent=1 // pred_check
      _
    $region35: #{tpu_custom_call.1} parent=1 // pred_check_branch
      %35 = sbr.rel (0) target = $region37
    $region36: #{tpu_custom_call.1} parent=1 // pred_region
      _
    $region37: #{tpu_custom_call.1} parent=1 // pred_fallthru
      _
    %v37 = vld [vmem:[%s0] sm:$0xff]
    %v38 = vld [vmem:[%s0 + $0x8] sm:$0xff]
    %v39 = vld [vmem:[%s0 + $0x10] sm:$0xff]
    %v40 = vld [vmem:[%s0 + $0x18] sm:$0xff]
    %v41 = vld [vmem:[%s0 + $0x20] sm:$0xff]
    %v42 = vld [vmem:[%s0 + $0x28] sm:$0xff]
    %v43 = vld [vmem:[%s0 + $0x30] sm:$0xff]
    %v44 = vld [vmem:[%s0 + $0x38] sm:$0xff]
    %v45 = vld [vmem:[%s0 + $0x40] sm:$0xff]
    %v46 = vld [vmem:[%s0 + $0x48] sm:$0xff]
    %v47 = vld [vmem:[%s0 + $0x50] sm:$0xff]
    %v48 = vld [vmem:[%s0 + $0x58] sm:$0xff]
    %v49 = vld [vmem:[%s0 + $0x60] sm:$0xff]
    %v50 = vld [vmem:[%s0 + $0x68] sm:$0xff]
    %v51 = vld [vmem:[%s0 + $0x70] sm:$0xff]
    %v52 = vld [vmem:[%s0 + $0x78] sm:$0xff]
    %v53 = vld [vmem:[%s0 + $0x80] sm:$0xff]
    %v54 = vld [vmem:[%s0 + $0x88] sm:$0xff]
    %v55 = vld [vmem:[%s0 + $0x90] sm:$0xff]
    %v56 = vld [vmem:[%s0 + $0x98] sm:$0xff]
    %v57 = vld [vmem:[%s0 + $0xa0] sm:$0xff]
    %v58 = vld [vmem:[%s0 + $0xa8] sm:$0xff]
    %v59 = vld [vmem:[%s0 + $0xb0] sm:$0xff]
    %v60 = vld [vmem:[%s0 + $0xb8] sm:$0xff]
    %v61 = vld [vmem:[%s0 + $0xc0] sm:$0xff]
    %v62 = vld [vmem:[%s0 + $0xc8] sm:$0xff]
    %v63 = vld [vmem:[%s0 + $0xd0] sm:$0xff]
    %v64 = vld [vmem:[%s0 + $0xd8] sm:$0xff]
    %v65 = vld [vmem:[%s0 + $0xe0] sm:$0xff]
    %v66 = vld [vmem:[%s0 + $0xe8] sm:$0xff]
    %v67 = vld [vmem:[%s0 + $0xf0] sm:$0xff]
    %v68 = vld [vmem:[%s0 + $0xf8] sm:$0xff]
    %v69 = vld [vmem:[%s0 + $0x100] sm:$0xff]
    %v70 = vld [vmem:[%s0 + $0x108] sm:$0xff]
    %v71 = vld [vmem:[%s0 + $0x110] sm:$0xff]
    %v72 = vld [vmem:[%s0 + $0x118] sm:$0xff]
    %v73 = vld [vmem:[%s0 + $0x120] sm:$0xff]
    %v74 = vld [vmem:[%s0 + $0x128] sm:$0xff]
    %v75 = vpack.c.bf16 %v38, %v37
    %v76 = vpack.c.bf16 %v40, %v39
    %v77 = vpack.c.bf16 %v42, %v41
    %v78 = vpack.c.bf16 %v44, %v43
    %v79 = vpack.c.bf16 %v46, %v45
    %v80 = vpack.c.bf16 %v48, %v47
    %v81 = vpack.c.bf16 %v50, %v49
    %v82 = vpack.c.bf16 %v52, %v51
    %v83 = vpack.c.bf16 %v54, %v53
    %v84 = vpack.c.bf16 %v56, %v55
    %v85 = vpack.c.bf16 %v58, %v57
    %v86 = vpack.c.bf16 %v60, %v59
    %v87 = vpack.c.bf16 %v62, %v61
    %v88 = vpack.c.bf16 %v64, %v63
    %v89 = vpack.c.bf16 %v66, %v65
    %v90 = vpack.c.bf16 %v68, %v67
    %v91 = vpack.c.bf16 %v70, %v69
    %v92 = vpack.c.bf16 %v72, %v71
    %v93 = vpack.c.bf16 %v74, %v73
    %v94 = vld [vmem:[%s1] sm:$0xf]
    %v95 = vld [vmem:[%s1 + $0x4] sm:$0xf]
    %v96 = vld [vmem:[%s1 + $0x8] sm:$0xf]
    %v97 = vld [vmem:[%s1 + $0xc] sm:$0xf]
    %v98 = vld [vmem:[%s2] sm:$0x1]
    %v100 = vperm.slane %v98, 0
    %v106 = vunpack.c.l.b16 %v94
    %v107 = vunpack.c.l.b16 %v95
    %v108 = vunpack.c.l.b16 %v96
    %v109 = vunpack.c.l.b16 %v97
    %v110 = vpack.c.b16 %v107, %v106
    %v111 = vpack.c.b16 %v109, %v108
    %vm114 = vcmask 261120
    %v116 = vsel %vm114, %v75, 0
    %v119 = vsel %vm114, %v76, 0
    %v122 = vsel %vm114, %v77, 0
    %v125 = vsel %vm114, %v78, 0
    %v128 = vsel %vm114, %v79, 0
    %v131 = vsel %vm114, %v80, 0
    %v134 = vsel %vm114, %v81, 0
    %v137 = vsel %vm114, %v82, 0
    %v140 = vsel %vm114, %v83, 0
    %v143 = vsel %vm114, %v84, 0
    %v146 = vsel %vm114, %v85, 0
    %v149 = vsel %vm114, %v86, 0
    %v152 = vsel %vm114, %v87, 0
    %v155 = vsel %vm114, %v88, 0
    %v158 = vsel %vm114, %v89, 0
    %v161 = vsel %vm114, %v90, 0
    %v164 = vsel %vm114, %v91, 0
    %v167 = vsel %vm114, %v92, 0
    %v170 = vsel %vm114, %v93, 0
    %172 = vmatpush.bf16.msra.mxu0 0
    %173 = vmatpush.bf16.msra.mxu0 0
    %174 = vmatpush.bf16.msra.mxu0 0
    %175 = vmatpush.bf16.msra.mxu0 0
    %176 = vmatpush.bf16.msra.mxu0 0
    %177 = vmatpush.bf16.msra.mxu0 0
    %178 = vmatpush.bf16.msra.mxu0 %v111
    %179 = vmatpush.bf16.msra.mxu0 %v110
    %180 = vmatmul.bf16.gmra.mxu0 %v116
    %v181 = vpop.f32.mrf.mxu0
    %v182 = vadd.f32 %v100, %v181
    %v183 = vpop.f32.mrf.mxu0
    %v184 = vadd.f32 %v100, %v183
    %185 = vmatmul.bf16.gmra.mxu0 %v119
    %v186 = vpop.f32.mrf.mxu0
    %v187 = vadd.f32 %v100, %v186
    %v188 = vpop.f32.mrf.mxu0
    %v189 = vadd.f32 %v100, %v188
    %190 = vmatmul.bf16.gmra.mxu0 %v122
    %v191 = vpop.f32.mrf.mxu0
    %v192 = vadd.f32 %v100, %v191
    %v193 = vpop.f32.mrf.mxu0
    %v194 = vadd.f32 %v100, %v193
    %195 = vmatmul.bf16.gmra.mxu0 %v125
    %v196 = vpop.f32.mrf.mxu0
    %v197 = vadd.f32 %v100, %v196
    %v198 = vpop.f32.mrf.mxu0
    %v199 = vadd.f32 %v100, %v198
    %200 = vmatmul.bf16.gmra.mxu0 %v128
    %v201 = vpop.f32.mrf.mxu0
    %v202 = vadd.f32 %v100, %v201
    %v203 = vpop.f32.mrf.mxu0
    %v204 = vadd.f32 %v100, %v203
    %205 = vmatmul.bf16.gmra.mxu0 %v131
    %v206 = vpop.f32.mrf.mxu0
    %v207 = vadd.f32 %v100, %v206
    %v208 = vpop.f32.mrf.mxu0
    %v209 = vadd.f32 %v100, %v208
    %210 = vmatmul.bf16.gmra.mxu0 %v134
    %v211 = vpop.f32.mrf.mxu0
    %v212 = vadd.f32 %v100, %v211
    %v213 = vpop.f32.mrf.mxu0
    %v214 = vadd.f32 %v100, %v213
    %215 = vmatmul.bf16.gmra.mxu0 %v137
    %v216 = vpop.f32.mrf.mxu0
    %v217 = vadd.f32 %v100, %v216
    %v218 = vpop.f32.mrf.mxu0
    %v219 = vadd.f32 %v100, %v218
    %220 = vmatmul.bf16.gmra.mxu0 %v140
    %v221 = vpop.f32.mrf.mxu0
    %v222 = vadd.f32 %v100, %v221
    %v223 = vpop.f32.mrf.mxu0
    %v224 = vadd.f32 %v100, %v223
    %225 = vmatmul.bf16.gmra.mxu0 %v143
    %v226 = vpop.f32.mrf.mxu0
    %v227 = vadd.f32 %v100, %v226
    %v228 = vpop.f32.mrf.mxu0
    %v229 = vadd.f32 %v100, %v228
    %230 = vmatmul.bf16.gmra.mxu0 %v146
    %v231 = vpop.f32.mrf.mxu0
    %v232 = vadd.f32 %v100, %v231
    %v233 = vpop.f32.mrf.mxu0
    %v234 = vadd.f32 %v100, %v233
    %235 = vmatmul.bf16.gmra.mxu0 %v149
    %v236 = vpop.f32.mrf.mxu0
    %v237 = vadd.f32 %v100, %v236
    %v238 = vpop.f32.mrf.mxu0
    %v239 = vadd.f32 %v100, %v238
    %240 = vmatmul.bf16.gmra.mxu0 %v152
    %v241 = vpop.f32.mrf.mxu0
    %v242 = vadd.f32 %v100, %v241
    %v243 = vpop.f32.mrf.mxu0
    %v244 = vadd.f32 %v100, %v243
    %245 = vmatmul.bf16.gmra.mxu0 %v155
    %v246 = vpop.f32.mrf.mxu0
    %v247 = vadd.f32 %v100, %v246
    %v248 = vpop.f32.mrf.mxu0
    %v249 = vadd.f32 %v100, %v248
    %250 = vmatmul.bf16.gmra.mxu0 %v158
    %v251 = vpop.f32.mrf.mxu0
    %v252 = vadd.f32 %v100, %v251
    %v253 = vpop.f32.mrf.mxu0
    %v254 = vadd.f32 %v100, %v253
    %255 = vmatmul.bf16.gmra.mxu0 %v161
    %v256 = vpop.f32.mrf.mxu0
    %v257 = vadd.f32 %v100, %v256
    %v258 = vpop.f32.mrf.mxu0
    %v259 = vadd.f32 %v100, %v258
    %260 = vmatmul.bf16.gmra.mxu0 %v164
    %v261 = vpop.f32.mrf.mxu0
    %v262 = vadd.f32 %v100, %v261
    %v263 = vpop.f32.mrf.mxu0
    %v264 = vadd.f32 %v100, %v263
    %265 = vmatmul.bf16.gmra.mxu0 %v167
    %v266 = vpop.f32.mrf.mxu0
    %v267 = vadd.f32 %v100, %v266
    %v268 = vpop.f32.mrf.mxu0
    %v269 = vadd.f32 %v100, %v268
    %270 = vmatmul.bf16.gmra.mxu0 %v170
    %v271 = vpop.f32.mrf.mxu0
    %v272 = vadd.f32 %v100, %v271
    %v273 = vpop.f32.mrf.mxu0
    %v274 = vadd.f32 %v100, %v273
    %275 = vdwg.mxu0
    %v276 = vmax.f32 %v182, 0.0
    %v277 = vmax.f32 %v184, 0.0
    %v278 = vmax.f32 %v187, 0.0
    %v279 = vmax.f32 %v189, 0.0
    %v280 = vmax.f32 %v192, 0.0
    %v281 = vmax.f32 %v194, 0.0
    %v282 = vmax.f32 %v197, 0.0
    %v283 = vmax.f32 %v199, 0.0
    %v284 = vmax.f32 %v202, 0.0
    %v285 = vmax.f32 %v204, 0.0
    %v286 = vmax.f32 %v207, 0.0
    %v287 = vmax.f32 %v209, 0.0
    %v288 = vmax.f32 %v212, 0.0
    %v289 = vmax.f32 %v214, 0.0
    %v290 = vmax.f32 %v217, 0.0
    %v291 = vmax.f32 %v219, 0.0
    %v292 = vmax.f32 %v222, 0.0
    %v293 = vmax.f32 %v224, 0.0
    %v294 = vmax.f32 %v227, 0.0
    %v295 = vmax.f32 %v229, 0.0
    %v296 = vmax.f32 %v232, 0.0
    %v297 = vmax.f32 %v234, 0.0
    %v298 = vmax.f32 %v237, 0.0
    %v299 = vmax.f32 %v239, 0.0
    %v300 = vmax.f32 %v242, 0.0
    %v301 = vmax.f32 %v244, 0.0
    %v302 = vmax.f32 %v247, 0.0
    %v303 = vmax.f32 %v249, 0.0
    %v304 = vmax.f32 %v252, 0.0
    %v305 = vmax.f32 %v254, 0.0
    %v306 = vmax.f32 %v257, 0.0
    %v307 = vmax.f32 %v259, 0.0
    %v308 = vmax.f32 %v262, 0.0
    %v309 = vmax.f32 %v264, 0.0
    %v310 = vmax.f32 %v267, 0.0
    %v311 = vmax.f32 %v269, 0.0
    %v312 = vmax.f32 %v272, 0.0
    %v313 = vmax.f32 %v274, 0.0
    %v314 = vpack.c.bf16 %v277, %v276
    %v315 = vpack.c.bf16 %v279, %v278
    %v316 = vpack.c.bf16 %v281, %v280
    %v317 = vpack.c.bf16 %v283, %v282
    %v318 = vpack.c.bf16 %v285, %v284
    %v319 = vpack.c.bf16 %v287, %v286
    %v320 = vpack.c.bf16 %v289, %v288
    %v321 = vpack.c.bf16 %v291, %v290
    %v322 = vpack.c.bf16 %v293, %v292
    %v323 = vpack.c.bf16 %v295, %v294
    %v324 = vpack.c.bf16 %v297, %v296
    %v325 = vpack.c.bf16 %v299, %v298
    %v326 = vpack.c.bf16 %v301, %v300
    %v327 = vpack.c.bf16 %v303, %v302
    %v328 = vpack.c.bf16 %v305, %v304
    %v329 = vpack.c.bf16 %v307, %v306
    %v330 = vpack.c.bf16 %v309, %v308
    %v331 = vpack.c.bf16 %v311, %v310
    %v332 = vpack.c.bf16 %v313, %v312
    %v333 = vld [vmem:[%s3] sm:$0xff]
    %v334 = vld [vmem:[%s3 + $0x8] sm:$0xff]
    %v335 = vld [vmem:[%s3 + $0x10] sm:$0xff]
    %v336 = vld [vmem:[%s3 + $0x18] sm:$0xff]
    %v337 = vld [vmem:[%s3 + $0x20] sm:$0xff]
    %v338 = vld [vmem:[%s3 + $0x28] sm:$0xff]
    %v339 = vld [vmem:[%s3 + $0x30] sm:$0xff]
    %v340 = vld [vmem:[%s3 + $0x38] sm:$0xff]
    %v341 = vld [vmem:[%s3 + $0x40] sm:$0xff]
    %v342 = vld [vmem:[%s3 + $0x48] sm:$0xff]
    %v343 = vld [vmem:[%s3 + $0x50] sm:$0xff]
    %v344 = vld [vmem:[%s3 + $0x58] sm:$0xff]
    %v345 = vld [vmem:[%s3 + $0x60] sm:$0xff]
    %v346 = vld [vmem:[%s3 + $0x68] sm:$0xff]
    %v347 = vld [vmem:[%s3 + $0x70] sm:$0xff]
    %v348 = vld [vmem:[%s3 + $0x78] sm:$0xff]
    %v349 = vld [vmem:[%s4] sm:$0x3]
    %v351 = vperm.slane %v349, 0
    %v352 = vperm.slane %v349, 1
    %v371 = vunpack.c.l.b16 %v333
    %v372 = vunpack.c.h.b16 %v333
    %v373 = vunpack.c.l.b16 %v334
    %v374 = vunpack.c.h.b16 %v334
    %v375 = vunpack.c.l.b16 %v335
    %v376 = vunpack.c.h.b16 %v335
    %v377 = vunpack.c.l.b16 %v336
    %v378 = vunpack.c.h.b16 %v336
    %v379 = vunpack.c.l.b16 %v337
    %v380 = vunpack.c.h.b16 %v337
    %v381 = vunpack.c.l.b16 %v338
    %v382 = vunpack.c.h.b16 %v338
    %v383 = vunpack.c.l.b16 %v339
    %v384 = vunpack.c.h.b16 %v339
    %v385 = vunpack.c.l.b16 %v340
    %v386 = vunpack.c.h.b16 %v340
    %v387 = vunpack.c.l.b16 %v341
    %v388 = vunpack.c.h.b16 %v341
    %v389 = vunpack.c.l.b16 %v342
    %v390 = vunpack.c.h.b16 %v342
    %v391 = vunpack.c.l.b16 %v343
    %v392 = vunpack.c.h.b16 %v343
    %v393 = vunpack.c.l.b16 %v344
    %v394 = vunpack.c.h.b16 %v344
    %v395 = vunpack.c.l.b16 %v345
    %v396 = vunpack.c.h.b16 %v345
    %v397 = vunpack.c.l.b16 %v346
    %v398 = vunpack.c.h.b16 %v346
    %v399 = vunpack.c.l.b16 %v347
    %v400 = vunpack.c.h.b16 %v347
    %v401 = vunpack.c.l.b16 %v348
    %v402 = vunpack.c.h.b16 %v348
    %v403 = vpack.c.b16 %v373, %v371
    %v404 = vpack.c.b16 %v374, %v372
    %v405 = vpack.c.b16 %v377, %v375
    %v406 = vpack.c.b16 %v378, %v376
    %v407 = vpack.c.b16 %v381, %v379
    %v408 = vpack.c.b16 %v382, %v380
    %v409 = vpack.c.b16 %v385, %v383
    %v410 = vpack.c.b16 %v386, %v384
    %v411 = vpack.c.b16 %v389, %v387
    %v412 = vpack.c.b16 %v390, %v388
    %v413 = vpack.c.b16 %v393, %v391
    %v414 = vpack.c.b16 %v394, %v392
    %v415 = vpack.c.b16 %v397, %v395
    %v416 = vpack.c.b16 %v398, %v396
    %v417 = vpack.c.b16 %v401, %v399
    %v418 = vpack.c.b16 %v402, %v400
    %435 = vmatpush.bf16.msra.mxu0 %v417
    %436 = vmatpush.bf16.msra.mxu0 %v415
    %437 = vmatpush.bf16.msra.mxu0 %v413
    %438 = vmatpush.bf16.msra.mxu0 %v411
    %439 = vmatpush.bf16.msra.mxu0 %v409
    %440 = vmatpush.bf16.msra.mxu0 %v407
    %441 = vmatpush.bf16.msra.mxu0 %v405
    %442 = vmatpush.bf16.msra.mxu0 %v403
    %443 = vmatmul.bf16.gmra.mxu0 %v314
    %v444 = vpop.f32.mrf.mxu0
    %v445 = vadd.f32 %v351, %v444
    %v446 = vpop.f32.mrf.mxu0
    %v447 = vadd.f32 %v351, %v446
    %448 = vmatmul.bf16.gmra.mxu0 %v315
    %v449 = vpop.f32.mrf.mxu0
    %v450 = vadd.f32 %v351, %v449
    %v451 = vpop.f32.mrf.mxu0
    %v452 = vadd.f32 %v351, %v451
    %453 = vmatmul.bf16.gmra.mxu0 %v316
    %v454 = vpop.f32.mrf.mxu0
    %v455 = vadd.f32 %v351, %v454
    %v456 = vpop.f32.mrf.mxu0
    %v457 = vadd.f32 %v351, %v456
    %458 = vmatmul.bf16.gmra.mxu0 %v317
    %v459 = vpop.f32.mrf.mxu0
    %v460 = vadd.f32 %v351, %v459
    %v461 = vpop.f32.mrf.mxu0
    %v462 = vadd.f32 %v351, %v461
    %463 = vmatmul.bf16.gmra.mxu0 %v318
    %v464 = vpop.f32.mrf.mxu0
    %v465 = vadd.f32 %v351, %v464
    %v466 = vpop.f32.mrf.mxu0
    %v467 = vadd.f32 %v351, %v466
    %468 = vmatmul.bf16.gmra.mxu0 %v319
    %v469 = vpop.f32.mrf.mxu0
    %v470 = vadd.f32 %v351, %v469
    %v471 = vpop.f32.mrf.mxu0
    %v472 = vadd.f32 %v351, %v471
    %473 = vmatmul.bf16.gmra.mxu0 %v320
    %v474 = vpop.f32.mrf.mxu0
    %v475 = vadd.f32 %v351, %v474
    %v476 = vpop.f32.mrf.mxu0
    %v477 = vadd.f32 %v351, %v476
    %478 = vmatmul.bf16.gmra.mxu0 %v321
    %v479 = vpop.f32.mrf.mxu0
    %v480 = vadd.f32 %v351, %v479
    %v481 = vpop.f32.mrf.mxu0
    %v482 = vadd.f32 %v351, %v481
    %483 = vmatmul.bf16.gmra.mxu0 %v322
    %v484 = vpop.f32.mrf.mxu0
    %v485 = vadd.f32 %v351, %v484
    %v486 = vpop.f32.mrf.mxu0
    %v487 = vadd.f32 %v351, %v486
    %488 = vmatmul.bf16.gmra.mxu0 %v323
    %v489 = vpop.f32.mrf.mxu0
    %v490 = vadd.f32 %v351, %v489
    %v491 = vpop.f32.mrf.mxu0
    %v492 = vadd.f32 %v351, %v491
    %493 = vmatmul.bf16.gmra.mxu0 %v324
    %v494 = vpop.f32.mrf.mxu0
    %v495 = vadd.f32 %v351, %v494
    %v496 = vpop.f32.mrf.mxu0
    %v497 = vadd.f32 %v351, %v496
    %498 = vmatmul.bf16.gmra.mxu0 %v325
    %v499 = vpop.f32.mrf.mxu0
    %v500 = vadd.f32 %v351, %v499
    %v501 = vpop.f32.mrf.mxu0
    %v502 = vadd.f32 %v351, %v501
    %503 = vmatmul.bf16.gmra.mxu0 %v326
    %v504 = vpop.f32.mrf.mxu0
    %v505 = vadd.f32 %v351, %v504
    %v506 = vpop.f32.mrf.mxu0
    %v507 = vadd.f32 %v351, %v506
    %508 = vmatmul.bf16.gmra.mxu0 %v327
    %v509 = vpop.f32.mrf.mxu0
    %v510 = vadd.f32 %v351, %v509
    %v511 = vpop.f32.mrf.mxu0
    %v512 = vadd.f32 %v351, %v511
    %513 = vmatmul.bf16.gmra.mxu0 %v328
    %v514 = vpop.f32.mrf.mxu0
    %v515 = vadd.f32 %v351, %v514
    %v516 = vpop.f32.mrf.mxu0
    %v517 = vadd.f32 %v351, %v516
    %518 = vmatmul.bf16.gmra.mxu0 %v329
    %v519 = vpop.f32.mrf.mxu0
    %v520 = vadd.f32 %v351, %v519
    %v521 = vpop.f32.mrf.mxu0
    %v522 = vadd.f32 %v351, %v521
    %523 = vmatmul.bf16.gmra.mxu0 %v330
    %v524 = vpop.f32.mrf.mxu0
    %v525 = vadd.f32 %v351, %v524
    %v526 = vpop.f32.mrf.mxu0
    %v527 = vadd.f32 %v351, %v526
    %528 = vmatmul.bf16.gmra.mxu0 %v331
    %v529 = vpop.f32.mrf.mxu0
    %v530 = vadd.f32 %v351, %v529
    %v531 = vpop.f32.mrf.mxu0
    %v532 = vadd.f32 %v351, %v531
    %533 = vmatmul.bf16.gmra.mxu0 %v332
    %v534 = vpop.f32.mrf.mxu0
    %v535 = vadd.f32 %v351, %v534
    %v536 = vpop.f32.mrf.mxu0
    %v537 = vadd.f32 %v351, %v536
    %538 = vdwg.mxu0
    %539 = vmatpush.bf16.msra.mxu0 %v418
    %540 = vmatpush.bf16.msra.mxu0 %v416
    %541 = vmatpush.bf16.msra.mxu0 %v414
    %542 = vmatpush.bf16.msra.mxu0 %v412
    %543 = vmatpush.bf16.msra.mxu0 %v410
    %544 = vmatpush.bf16.msra.mxu0 %v408
    %545 = vmatpush.bf16.msra.mxu0 %v406
    %546 = vmatpush.bf16.msra.mxu0 %v404
    %547 = vmatmul.bf16.gmra.mxu0 %v314
    %v548 = vpop.f32.mrf.mxu0
    %v549 = vadd.f32 %v352, %v548
    %v550 = vpop.f32.mrf.mxu0
    %v551 = vadd.f32 %v352, %v550
    %552 = vmatmul.bf16.gmra.mxu0 %v315
    %v553 = vpop.f32.mrf.mxu0
    %v554 = vadd.f32 %v352, %v553
    %v555 = vpop.f32.mrf.mxu0
    %v556 = vadd.f32 %v352, %v555
    %557 = vmatmul.bf16.gmra.mxu0 %v316
    %v558 = vpop.f32.mrf.mxu0
    %v559 = vadd.f32 %v352, %v558
    %v560 = vpop.f32.mrf.mxu0
    %v561 = vadd.f32 %v352, %v560
    %562 = vmatmul.bf16.gmra.mxu0 %v317
    %v563 = vpop.f32.mrf.mxu0
    %v564 = vadd.f32 %v352, %v563
    %v565 = vpop.f32.mrf.mxu0
    %v566 = vadd.f32 %v352, %v565
    %567 = vmatmul.bf16.gmra.mxu0 %v318
    %v568 = vpop.f32.mrf.mxu0
    %v569 = vadd.f32 %v352, %v568
    %v570 = vpop.f32.mrf.mxu0
    %v571 = vadd.f32 %v352, %v570
    %572 = vmatmul.bf16.gmra.mxu0 %v319
    %v573 = vpop.f32.mrf.mxu0
    %v574 = vadd.f32 %v352, %v573
    %v575 = vpop.f32.mrf.mxu0
    %v576 = vadd.f32 %v352, %v575
    %577 = vmatmul.bf16.gmra.mxu0 %v320
    %v578 = vpop.f32.mrf.mxu0
    %v579 = vadd.f32 %v352, %v578
    %v580 = vpop.f32.mrf.mxu0
    %v581 = vadd.f32 %v352, %v580
    %582 = vmatmul.bf16.gmra.mxu0 %v321
    %v583 = vpop.f32.mrf.mxu0
    %v584 = vadd.f32 %v352, %v583
    %v585 = vpop.f32.mrf.mxu0
    %v586 = vadd.f32 %v352, %v585
    %587 = vmatmul.bf16.gmra.mxu0 %v322
    %v588 = vpop.f32.mrf.mxu0
    %v589 = vadd.f32 %v352, %v588
    %v590 = vpop.f32.mrf.mxu0
    %v591 = vadd.f32 %v352, %v590
    %592 = vmatmul.bf16.gmra.mxu0 %v323
    %v593 = vpop.f32.mrf.mxu0
    %v594 = vadd.f32 %v352, %v593
    %v595 = vpop.f32.mrf.mxu0
    %v596 = vadd.f32 %v352, %v595
    %597 = vmatmul.bf16.gmra.mxu0 %v324
    %v598 = vpop.f32.mrf.mxu0
    %v599 = vadd.f32 %v352, %v598
    %v600 = vpop.f32.mrf.mxu0
    %v601 = vadd.f32 %v352, %v600
    %602 = vmatmul.bf16.gmra.mxu0 %v325
    %v603 = vpop.f32.mrf.mxu0
    %v604 = vadd.f32 %v352, %v603
    %v605 = vpop.f32.mrf.mxu0
    %v606 = vadd.f32 %v352, %v605
    %607 = vmatmul.bf16.gmra.mxu0 %v326
    %v608 = vpop.f32.mrf.mxu0
    %v609 = vadd.f32 %v352, %v608
    %v610 = vpop.f32.mrf.mxu0
    %v611 = vadd.f32 %v352, %v610
    %612 = vmatmul.bf16.gmra.mxu0 %v327
    %v613 = vpop.f32.mrf.mxu0
    %v614 = vadd.f32 %v352, %v613
    %v615 = vpop.f32.mrf.mxu0
    %v616 = vadd.f32 %v352, %v615
    %617 = vmatmul.bf16.gmra.mxu0 %v328
    %v618 = vpop.f32.mrf.mxu0
    %v619 = vadd.f32 %v352, %v618
    %v620 = vpop.f32.mrf.mxu0
    %v621 = vadd.f32 %v352, %v620
    %622 = vmatmul.bf16.gmra.mxu0 %v329
    %v623 = vpop.f32.mrf.mxu0
    %v624 = vadd.f32 %v352, %v623
    %v625 = vpop.f32.mrf.mxu0
    %v626 = vadd.f32 %v352, %v625
    %627 = vmatmul.bf16.gmra.mxu0 %v330
    %v628 = vpop.f32.mrf.mxu0
    %v629 = vadd.f32 %v352, %v628
    %v630 = vpop.f32.mrf.mxu0
    %v631 = vadd.f32 %v352, %v630
    %632 = vmatmul.bf16.gmra.mxu0 %v331
    %v633 = vpop.f32.mrf.mxu0
    %v634 = vadd.f32 %v352, %v633
    %v635 = vpop.f32.mrf.mxu0
    %v636 = vadd.f32 %v352, %v635
    %637 = vmatmul.bf16.gmra.mxu0 %v332
    %v638 = vpop.f32.mrf.mxu0
    %v639 = vadd.f32 %v352, %v638
    %v640 = vpop.f32.mrf.mxu0
    %v641 = vadd.f32 %v352, %v640
    %642 = vdwg.mxu0
    %643 = vst [vmem:[#allocation4] sm:$0xff] %v445
    %644 = vst [vmem:[#allocation4 + $0x8] sm:$0xff] %v549
    %645 = vst [vmem:[#allocation4 + $0x10] sm:$0xff] %v447
    %646 = vst [vmem:[#allocation4 + $0x18] sm:$0xff] %v551
    %647 = vst [vmem:[#allocation4 + $0x20] sm:$0xff] %v450
    %648 = vst [vmem:[#allocation4 + $0x28] sm:$0xff] %v554
    %649 = vst [vmem:[#allocation4 + $0x30] sm:$0xff] %v452
    %650 = vst [vmem:[#allocation4 + $0x38] sm:$0xff] %v556
    %651 = vst [vmem:[#allocation4 + $0x40] sm:$0xff] %v455
    %652 = vst [vmem:[#allocation4 + $0x48] sm:$0xff] %v559
    %653 = vst [vmem:[#allocation4 + $0x50] sm:$0xff] %v457
    %654 = vst [vmem:[#allocation4 + $0x58] sm:$0xff] %v561
    %655 = vst [vmem:[#allocation4 + $0x60] sm:$0xff] %v460
    %656 = vst [vmem:[#allocation4 + $0x68] sm:$0xff] %v564
    %657 = vst [vmem:[#allocation4 + $0x70] sm:$0xff] %v462
    %658 = vst [vmem:[#allocation4 + $0x78] sm:$0xff] %v566
    %659 = vst [vmem:[#allocation4 + $0x80] sm:$0xff] %v465
    %660 = vst [vmem:[#allocation4 + $0x88] sm:$0xff] %v569
    %661 = vst [vmem:[#allocation4 + $0x90] sm:$0xff] %v467
    %662 = vst [vmem:[#allocation4 + $0x98] sm:$0xff] %v571
    %663 = vst [vmem:[#allocation4 + $0xa0] sm:$0xff] %v470
    %664 = vst [vmem:[#allocation4 + $0xa8] sm:$0xff] %v574
    %665 = vst [vmem:[#allocation4 + $0xb0] sm:$0xff] %v472
    %666 = vst [vmem:[#allocation4 + $0xb8] sm:$0xff] %v576
    %667 = vst [vmem:[#allocation4 + $0xc0] sm:$0xff] %v475
    %668 = vst [vmem:[#allocation4 + $0xc8] sm:$0xff] %v579
    %669 = vst [vmem:[#allocation4 + $0xd0] sm:$0xff] %v477
    %670 = vst [vmem:[#allocation4 + $0xd8] sm:$0xff] %v581
    %671 = vst [vmem:[#allocation4 + $0xe0] sm:$0xff] %v480
    %672 = vst [vmem:[#allocation4 + $0xe8] sm:$0xff] %v584
    %673 = vst [vmem:[#allocation4 + $0xf0] sm:$0xff] %v482
    %674 = vst [vmem:[#allocation4 + $0xf8] sm:$0xff] %v586
    %675 = vst [vmem:[#allocation4 + $0x100] sm:$0xff] %v485
    %676 = vst [vmem:[#allocation4 + $0x108] sm:$0xff] %v589
    %677 = vst [vmem:[#allocation4 + $0x110] sm:$0xff] %v487
    %678 = vst [vmem:[#allocation4 + $0x118] sm:$0xff] %v591
    %679 = vst [vmem:[#allocation4 + $0x120] sm:$0xff] %v490
    %680 = vst [vmem:[#allocation4 + $0x128] sm:$0xff] %v594
    %681 = vst [vmem:[#allocation4 + $0x130] sm:$0xff] %v492
    %682 = vst [vmem:[#allocation4 + $0x138] sm:$0xff] %v596
    %683 = vst [vmem:[#allocation4 + $0x140] sm:$0xff] %v495
    %684 = vst [vmem:[#allocation4 + $0x148] sm:$0xff] %v599
    %685 = vst [vmem:[#allocation4 + $0x150] sm:$0xff] %v497
    %686 = vst [vmem:[#allocation4 + $0x158] sm:$0xff] %v601
    %687 = vst [vmem:[#allocation4 + $0x160] sm:$0xff] %v500
    %688 = vst [vmem:[#allocation4 + $0x168] sm:$0xff] %v604
    %689 = vst [vmem:[#allocation4 + $0x170] sm:$0xff] %v502
    %690 = vst [vmem:[#allocation4 + $0x178] sm:$0xff] %v606
    %691 = vst [vmem:[#allocation4 + $0x180] sm:$0xff] %v505
    %692 = vst [vmem:[#allocation4 + $0x188] sm:$0xff] %v609
    %693 = vst [vmem:[#allocation4 + $0x190] sm:$0xff] %v507
    %694 = vst [vmem:[#allocation4 + $0x198] sm:$0xff] %v611
    %695 = vst [vmem:[#allocation4 + $0x1a0] sm:$0xff] %v510
    %696 = vst [vmem:[#allocation4 + $0x1a8] sm:$0xff] %v614
    %697 = vst [vmem:[#allocation4 + $0x1b0] sm:$0xff] %v512
    %698 = vst [vmem:[#allocation4 + $0x1b8] sm:$0xff] %v616
    %699 = vst [vmem:[#allocation4 + $0x1c0] sm:$0xff] %v515
    %700 = vst [vmem:[#allocation4 + $0x1c8] sm:$0xff] %v619
    %701 = vst [vmem:[#allocation4 + $0x1d0] sm:$0xff] %v517
    %702 = vst [vmem:[#allocation4 + $0x1d8] sm:$0xff] %v621
    %703 = vst [vmem:[#allocation4 + $0x1e0] sm:$0xff] %v520
    %704 = vst [vmem:[#allocation4 + $0x1e8] sm:$0xff] %v624
    %705 = vst [vmem:[#allocation4 + $0x1f0] sm:$0xff] %v522
    %706 = vst [vmem:[#allocation4 + $0x1f8] sm:$0xff] %v626
    %707 = vst [vmem:[#allocation4 + $0x200] sm:$0xff] %v525
    %708 = vst [vmem:[#allocation4 + $0x208] sm:$0xff] %v629
    %709 = vst [vmem:[#allocation4 + $0x210] sm:$0xff] %v527
    %710 = vst [vmem:[#allocation4 + $0x218] sm:$0xff] %v631
    %711 = vst [vmem:[#allocation4 + $0x220] sm:$0xff] %v530
    %712 = vst [vmem:[#allocation4 + $0x228] sm:$0xff] %v634
    %713 = vst [vmem:[#allocation4 + $0x230] sm:$0xff] %v532
    %714 = vst [vmem:[#allocation4 + $0x238] sm:$0xff] %v636
    %715 = vst [vmem:[#allocation4 + $0x240] sm:$0xff] %v535
    %716 = vst [vmem:[#allocation4 + $0x248] sm:$0xff] %v639
    %717 = vst [vmem:[#allocation4 + $0x250] sm:$0xff] %v537
    %718 = vst [vmem:[#allocation4 + $0x258] sm:$0xff] %v641
    %v719 = vpack.c.bf16 %v447, %v445
    %v720 = vpack.c.bf16 %v452, %v450
    %v721 = vpack.c.bf16 %v457, %v455
    %v722 = vpack.c.bf16 %v462, %v460
    %v723 = vpack.c.bf16 %v467, %v465
    %v724 = vpack.c.bf16 %v472, %v470
    %v725 = vpack.c.bf16 %v477, %v475
    %v726 = vpack.c.bf16 %v482, %v480
    %v727 = vpack.c.bf16 %v487, %v485
    %v728 = vpack.c.bf16 %v492, %v490
    %v729 = vpack.c.bf16 %v497, %v495
    %v730 = vpack.c.bf16 %v502, %v500
    %v731 = vpack.c.bf16 %v507, %v505
    %v732 = vpack.c.bf16 %v512, %v510
    %v733 = vpack.c.bf16 %v517, %v515
    %v734 = vpack.c.bf16 %v522, %v520
    %v735 = vpack.c.bf16 %v527, %v525
    %v736 = vpack.c.bf16 %v532, %v530
    %v737 = vpack.c.bf16 %v537, %v535
    %v738 = vld [vmem:[%s5] sm:$0xf]
    %v739 = vld [vmem:[%s5 + $0x4] sm:$0xf]
    %v740 = vld [vmem:[%s5 + $0x8] sm:$0xf]
    %v741 = vld [vmem:[%s5 + $0xc] sm:$0xf]
    %v742 = vld [vmem:[%s5 + $0x10] sm:$0xf]
    %v743 = vld [vmem:[%s5 + $0x14] sm:$0xf]
    %v744 = vld [vmem:[%s5 + $0x18] sm:$0xf]
    %v745 = vld [vmem:[%s5 + $0x1c] sm:$0xf]
    %v746 = vld [vmem:[%s5 + $0x20] sm:$0xf]
    %v747 = vld [vmem:[%s5 + $0x24] sm:$0xf]
    %v748 = vld [vmem:[%s5 + $0x28] sm:$0xf]
    %v749 = vld [vmem:[%s5 + $0x2c] sm:$0xf]
    %v750 = vld [vmem:[%s5 + $0x30] sm:$0xf]
    %v751 = vld [vmem:[%s5 + $0x34] sm:$0xf]
    %v752 = vld [vmem:[%s5 + $0x38] sm:$0xf]
    %v753 = vld [vmem:[%s5 + $0x3c] sm:$0xf]
    %v754 = vld [vmem:[%s6] sm:$0x1]
    %v756 = vperm.slane %v754, 0
    %v774 = vunpack.c.l.b16 %v738
    %v775 = vunpack.c.l.b16 %v739
    %v776 = vunpack.c.l.b16 %v740
    %v777 = vunpack.c.l.b16 %v741
    %v778 = vunpack.c.l.b16 %v742
    %v779 = vunpack.c.l.b16 %v743
    %v780 = vunpack.c.l.b16 %v744
    %v781 = vunpack.c.l.b16 %v745
    %v782 = vunpack.c.l.b16 %v746
    %v783 = vunpack.c.l.b16 %v747
    %v784 = vunpack.c.l.b16 %v748
    %v785 = vunpack.c.l.b16 %v749
    %v786 = vunpack.c.l.b16 %v750
    %v787 = vunpack.c.l.b16 %v751
    %v788 = vunpack.c.l.b16 %v752
    %v789 = vunpack.c.l.b16 %v753
    %v790 = vpack.c.b16 %v775, %v774
    %v791 = vpack.c.b16 %v777, %v776
    %v792 = vpack.c.b16 %v779, %v778
    %v793 = vpack.c.b16 %v781, %v780
    %v794 = vpack.c.b16 %v783, %v782
    %v795 = vpack.c.b16 %v785, %v784
    %v796 = vpack.c.b16 %v787, %v786
    %v797 = vpack.c.b16 %v789, %v788
    %806 = vmatpush.bf16.msra.mxu0 %v797
    %807 = vmatpush.bf16.msra.mxu0 %v796
    %808 = vmatpush.bf16.msra.mxu0 %v795
    %809 = vmatpush.bf16.msra.mxu0 %v794
    %810 = vmatpush.bf16.msra.mxu0 %v793
    %811 = vmatpush.bf16.msra.mxu0 %v792
    %812 = vmatpush.bf16.msra.mxu0 %v791
    %813 = vmatpush.bf16.msra.mxu0 %v790
    %814 = vmatmul.bf16.gmra.mxu0 %v719
    %v815 = vpop.f32.mrf.mxu0
    %v816 = vadd.f32 %v756, %v815
    %v817 = vpop.f32.mrf.mxu0
    %v818 = vadd.f32 %v756, %v817
    %819 = vmatmul.bf16.gmra.mxu0 %v720
    %v820 = vpop.f32.mrf.mxu0
    %v821 = vadd.f32 %v756, %v820
    %v822 = vpop.f32.mrf.mxu0
    %v823 = vadd.f32 %v756, %v822
    %824 = vmatmul.bf16.gmra.mxu0 %v721
    %v825 = vpop.f32.mrf.mxu0
    %v826 = vadd.f32 %v756, %v825
    %v827 = vpop.f32.mrf.mxu0
    %v828 = vadd.f32 %v756, %v827
    %829 = vmatmul.bf16.gmra.mxu0 %v722
    %v830 = vpop.f32.mrf.mxu0
    %v831 = vadd.f32 %v756, %v830
    %v832 = vpop.f32.mrf.mxu0
    %v833 = vadd.f32 %v756, %v832
    %834 = vmatmul.bf16.gmra.mxu0 %v723
    %v835 = vpop.f32.mrf.mxu0
    %v836 = vadd.f32 %v756, %v835
    %v837 = vpop.f32.mrf.mxu0
    %v838 = vadd.f32 %v756, %v837
    %839 = vmatmul.bf16.gmra.mxu0 %v724
    %v840 = vpop.f32.mrf.mxu0
    %v841 = vadd.f32 %v756, %v840
    %v842 = vpop.f32.mrf.mxu0
    %v843 = vadd.f32 %v756, %v842
    %844 = vmatmul.bf16.gmra.mxu0 %v725
    %v845 = vpop.f32.mrf.mxu0
    %v846 = vadd.f32 %v756, %v845
    %v847 = vpop.f32.mrf.mxu0
    %v848 = vadd.f32 %v756, %v847
    %849 = vmatmul.bf16.gmra.mxu0 %v726
    %v850 = vpop.f32.mrf.mxu0
    %v851 = vadd.f32 %v756, %v850
    %v852 = vpop.f32.mrf.mxu0
    %v853 = vadd.f32 %v756, %v852
    %854 = vmatmul.bf16.gmra.mxu0 %v727
    %v855 = vpop.f32.mrf.mxu0
    %v856 = vadd.f32 %v756, %v855
    %v857 = vpop.f32.mrf.mxu0
    %v858 = vadd.f32 %v756, %v857
    %859 = vmatmul.bf16.gmra.mxu0 %v728
    %v860 = vpop.f32.mrf.mxu0
    %v861 = vadd.f32 %v756, %v860
    %v862 = vpop.f32.mrf.mxu0
    %v863 = vadd.f32 %v756, %v862
    %864 = vmatmul.bf16.gmra.mxu0 %v729
    %v865 = vpop.f32.mrf.mxu0
    %v866 = vadd.f32 %v756, %v865
    %v867 = vpop.f32.mrf.mxu0
    %v868 = vadd.f32 %v756, %v867
    %869 = vmatmul.bf16.gmra.mxu0 %v730
    %v870 = vpop.f32.mrf.mxu0
    %v871 = vadd.f32 %v756, %v870
    %v872 = vpop.f32.mrf.mxu0
    %v873 = vadd.f32 %v756, %v872
    %874 = vmatmul.bf16.gmra.mxu0 %v731
    %v875 = vpop.f32.mrf.mxu0
    %v876 = vadd.f32 %v756, %v875
    %v877 = vpop.f32.mrf.mxu0
    %v878 = vadd.f32 %v756, %v877
    %879 = vmatmul.bf16.gmra.mxu0 %v732
    %v880 = vpop.f32.mrf.mxu0
    %v881 = vadd.f32 %v756, %v880
    %v882 = vpop.f32.mrf.mxu0
    %v883 = vadd.f32 %v756, %v882
    %884 = vmatmul.bf16.gmra.mxu0 %v733
    %v885 = vpop.f32.mrf.mxu0
    %v886 = vadd.f32 %v756, %v885
    %v887 = vpop.f32.mrf.mxu0
    %v888 = vadd.f32 %v756, %v887
    %889 = vmatmul.bf16.gmra.mxu0 %v734
    %v890 = vpop.f32.mrf.mxu0
    %v891 = vadd.f32 %v756, %v890
    %v892 = vpop.f32.mrf.mxu0
    %v893 = vadd.f32 %v756, %v892
    %894 = vmatmul.bf16.gmra.mxu0 %v735
    %v895 = vpop.f32.mrf.mxu0
    %v896 = vadd.f32 %v756, %v895
    %v897 = vpop.f32.mrf.mxu0
    %v898 = vadd.f32 %v756, %v897
    %899 = vmatmul.bf16.gmra.mxu0 %v736
    %v900 = vpop.f32.mrf.mxu0
    %v901 = vadd.f32 %v756, %v900
    %v902 = vpop.f32.mrf.mxu0
    %v903 = vadd.f32 %v756, %v902
    %904 = vmatmul.bf16.gmra.mxu0 %v737
    %v905 = vpop.f32.mrf.mxu0
    %v906 = vadd.f32 %v756, %v905
    %v907 = vpop.f32.mrf.mxu0
    %v908 = vadd.f32 %v756, %v907
    %909 = vdwg.mxu0
    %v910 = vmax.f32 %v816, 0.0
    %v911 = vmax.f32 %v818, 0.0
    %v912 = vmax.f32 %v821, 0.0
    %v913 = vmax.f32 %v823, 0.0
    %v914 = vmax.f32 %v826, 0.0
    %v915 = vmax.f32 %v828, 0.0
    %v916 = vmax.f32 %v831, 0.0
    %v917 = vmax.f32 %v833, 0.0
    %v918 = vmax.f32 %v836, 0.0
    %v919 = vmax.f32 %v838, 0.0
    %v920 = vmax.f32 %v841, 0.0
    %v921 = vmax.f32 %v843, 0.0
    %v922 = vmax.f32 %v846, 0.0
    %v923 = vmax.f32 %v848, 0.0
    %v924 = vmax.f32 %v851, 0.0
    %v925 = vmax.f32 %v853, 0.0
    %v926 = vmax.f32 %v856, 0.0
    %v927 = vmax.f32 %v858, 0.0
    %v928 = vmax.f32 %v861, 0.0
    %v929 = vmax.f32 %v863, 0.0
    %v930 = vmax.f32 %v866, 0.0
    %v931 = vmax.f32 %v868, 0.0
    %v932 = vmax.f32 %v871, 0.0
    %v933 = vmax.f32 %v873, 0.0
    %v934 = vmax.f32 %v876, 0.0
    %v935 = vmax.f32 %v878, 0.0
    %v936 = vmax.f32 %v881, 0.0
    %v937 = vmax.f32 %v883, 0.0
    %v938 = vmax.f32 %v886, 0.0
    %v939 = vmax.f32 %v888, 0.0
    %v940 = vmax.f32 %v891, 0.0
    %v941 = vmax.f32 %v893, 0.0
    %v942 = vmax.f32 %v896, 0.0
    %v943 = vmax.f32 %v898, 0.0
    %v944 = vmax.f32 %v901, 0.0
    %v945 = vmax.f32 %v903, 0.0
    %v946 = vmax.f32 %v906, 0.0
    %v947 = vmax.f32 %v908, 0.0
    %v948 = vpack.c.bf16 %v911, %v910
    %v949 = vpack.c.bf16 %v913, %v912
    %v950 = vpack.c.bf16 %v915, %v914
    %v951 = vpack.c.bf16 %v917, %v916
    %v952 = vpack.c.bf16 %v919, %v918
    %v953 = vpack.c.bf16 %v921, %v920
    %v954 = vpack.c.bf16 %v923, %v922
    %v955 = vpack.c.bf16 %v925, %v924
    %v956 = vpack.c.bf16 %v927, %v926
    %v957 = vpack.c.bf16 %v929, %v928
    %v958 = vpack.c.bf16 %v931, %v930
    %v959 = vpack.c.bf16 %v933, %v932
    %v960 = vpack.c.bf16 %v935, %v934
    %v961 = vpack.c.bf16 %v937, %v936
    %v962 = vpack.c.bf16 %v939, %v938
    %v963 = vpack.c.bf16 %v941, %v940
    %v964 = vpack.c.bf16 %v943, %v942
    %v965 = vpack.c.bf16 %v945, %v944
    %v966 = vpack.c.bf16 %v947, %v946
    %v967 = vld [vmem:[%s7] sm:$0xf]
    %v968 = vld [vmem:[%s7 + $0x4] sm:$0xf]
    %v969 = vld [vmem:[%s7 + $0x8] sm:$0xf]
    %v970 = vld [vmem:[%s7 + $0xc] sm:$0xf]
    %v971 = vld [vmem:[%s7 + $0x10] sm:$0xf]
    %v972 = vld [vmem:[%s7 + $0x14] sm:$0xf]
    %v973 = vld [vmem:[%s7 + $0x18] sm:$0xf]
    %v974 = vld [vmem:[%s7 + $0x1c] sm:$0xf]
    %v975 = vld [vmem:[%s7 + $0x20] sm:$0xf]
    %v976 = vld [vmem:[%s7 + $0x24] sm:$0xf]
    %v977 = vld [vmem:[%s7 + $0x28] sm:$0xf]
    %v978 = vld [vmem:[%s7 + $0x2c] sm:$0xf]
    %v979 = vld [vmem:[%s7 + $0x30] sm:$0xf]
    %v980 = vld [vmem:[%s7 + $0x34] sm:$0xf]
    %v981 = vld [vmem:[%s7 + $0x38] sm:$0xf]
    %v982 = vld [vmem:[%s7 + $0x3c] sm:$0xf]
    %v983 = vld [vmem:[%s8] sm:$0x1]
    %v985 = vperm.slane %v983, 0
    %v1003 = vunpack.c.l.b16 %v967
    %v1004 = vunpack.c.l.b16 %v968
    %v1005 = vunpack.c.l.b16 %v969
    %v1006 = vunpack.c.l.b16 %v970
    %v1007 = vunpack.c.l.b16 %v971
    %v1008 = vunpack.c.l.b16 %v972
    %v1009 = vunpack.c.l.b16 %v973
    %v1010 = vunpack.c.l.b16 %v974
    %v1011 = vunpack.c.l.b16 %v975
    %v1012 = vunpack.c.l.b16 %v976
    %v1013 = vunpack.c.l.b16 %v977
    %v1014 = vunpack.c.l.b16 %v978
    %v1015 = vunpack.c.l.b16 %v979
    %v1016 = vunpack.c.l.b16 %v980
    %v1017 = vunpack.c.l.b16 %v981
    %v1018 = vunpack.c.l.b16 %v982
    %v1019 = vpack.c.b16 %v1004, %v1003
    %v1020 = vpack.c.b16 %v1006, %v1005
    %v1021 = vpack.c.b16 %v1008, %v1007
    %v1022 = vpack.c.b16 %v1010, %v1009
    %v1023 = vpack.c.b16 %v1012, %v1011
    %v1024 = vpack.c.b16 %v1014, %v1013
    %v1025 = vpack.c.b16 %v1016, %v1015
    %v1026 = vpack.c.b16 %v1018, %v1017
    %1035 = vmatpush.bf16.msra.mxu0 %v1026
    %1036 = vmatpush.bf16.msra.mxu0 %v1025
    %1037 = vmatpush.bf16.msra.mxu0 %v1024
    %1038 = vmatpush.bf16.msra.mxu0 %v1023
    %1039 = vmatpush.bf16.msra.mxu0 %v1022
    %1040 = vmatpush.bf16.msra.mxu0 %v1021
    %1041 = vmatpush.bf16.msra.mxu0 %v1020
    %1042 = vmatpush.bf16.msra.mxu0 %v1019
    %1043 = vmatmul.bf16.gmra.mxu0 %v948
    %v1044 = vpop.f32.mrf.mxu0
    %v1045 = vadd.f32 %v985, %v1044
    %v1046 = vpop.f32.mrf.mxu0
    %v1047 = vadd.f32 %v985, %v1046
    %1048 = vmatmul.bf16.gmra.mxu0 %v949
    %v1049 = vpop.f32.mrf.mxu0
    %v1050 = vadd.f32 %v985, %v1049
    %v1051 = vpop.f32.mrf.mxu0
    %v1052 = vadd.f32 %v985, %v1051
    %1053 = vmatmul.bf16.gmra.mxu0 %v950
    %v1054 = vpop.f32.mrf.mxu0
    %v1055 = vadd.f32 %v985, %v1054
    %v1056 = vpop.f32.mrf.mxu0
    %v1057 = vadd.f32 %v985, %v1056
    %1058 = vmatmul.bf16.gmra.mxu0 %v951
    %v1059 = vpop.f32.mrf.mxu0
    %v1060 = vadd.f32 %v985, %v1059
    %v1061 = vpop.f32.mrf.mxu0
    %v1062 = vadd.f32 %v985, %v1061
    %1063 = vmatmul.bf16.gmra.mxu0 %v952
    %v1064 = vpop.f32.mrf.mxu0
    %v1065 = vadd.f32 %v985, %v1064
    %v1066 = vpop.f32.mrf.mxu0
    %v1067 = vadd.f32 %v985, %v1066
    %1068 = vmatmul.bf16.gmra.mxu0 %v953
    %v1069 = vpop.f32.mrf.mxu0
    %v1070 = vadd.f32 %v985, %v1069
    %v1071 = vpop.f32.mrf.mxu0
    %v1072 = vadd.f32 %v985, %v1071
    %1073 = vmatmul.bf16.gmra.mxu0 %v954
    %v1074 = vpop.f32.mrf.mxu0
    %v1075 = vadd.f32 %v985, %v1074
    %v1076 = vpop.f32.mrf.mxu0
    %v1077 = vadd.f32 %v985, %v1076
    %1078 = vmatmul.bf16.gmra.mxu0 %v955
    %v1079 = vpop.f32.mrf.mxu0
    %v1080 = vadd.f32 %v985, %v1079
    %v1081 = vpop.f32.mrf.mxu0
    %v1082 = vadd.f32 %v985, %v1081
    %1083 = vmatmul.bf16.gmra.mxu0 %v956
    %v1084 = vpop.f32.mrf.mxu0
    %v1085 = vadd.f32 %v985, %v1084
    %v1086 = vpop.f32.mrf.mxu0
    %v1087 = vadd.f32 %v985, %v1086
    %1088 = vmatmul.bf16.gmra.mxu0 %v957
    %v1089 = vpop.f32.mrf.mxu0
    %v1090 = vadd.f32 %v985, %v1089
    %v1091 = vpop.f32.mrf.mxu0
    %v1092 = vadd.f32 %v985, %v1091
    %1093 = vmatmul.bf16.gmra.mxu0 %v958
    %v1094 = vpop.f32.mrf.mxu0
    %v1095 = vadd.f32 %v985, %v1094
    %v1096 = vpop.f32.mrf.mxu0
    %v1097 = vadd.f32 %v985, %v1096
    %1098 = vmatmul.bf16.gmra.mxu0 %v959
    %v1099 = vpop.f32.mrf.mxu0
    %v1100 = vadd.f32 %v985, %v1099
    %v1101 = vpop.f32.mrf.mxu0
    %v1102 = vadd.f32 %v985, %v1101
    %1103 = vmatmul.bf16.gmra.mxu0 %v960
    %v1104 = vpop.f32.mrf.mxu0
    %v1105 = vadd.f32 %v985, %v1104
    %v1106 = vpop.f32.mrf.mxu0
    %v1107 = vadd.f32 %v985, %v1106
    %1108 = vmatmul.bf16.gmra.mxu0 %v961
    %v1109 = vpop.f32.mrf.mxu0
    %v1110 = vadd.f32 %v985, %v1109
    %v1111 = vpop.f32.mrf.mxu0
    %v1112 = vadd.f32 %v985, %v1111
    %1113 = vmatmul.bf16.gmra.mxu0 %v962
    %v1114 = vpop.f32.mrf.mxu0
    %v1115 = vadd.f32 %v985, %v1114
    %v1116 = vpop.f32.mrf.mxu0
    %v1117 = vadd.f32 %v985, %v1116
    %1118 = vmatmul.bf16.gmra.mxu0 %v963
    %v1119 = vpop.f32.mrf.mxu0
    %v1120 = vadd.f32 %v985, %v1119
    %v1121 = vpop.f32.mrf.mxu0
    %v1122 = vadd.f32 %v985, %v1121
    %1123 = vmatmul.bf16.gmra.mxu0 %v964
    %v1124 = vpop.f32.mrf.mxu0
    %v1125 = vadd.f32 %v985, %v1124
    %v1126 = vpop.f32.mrf.mxu0
    %v1127 = vadd.f32 %v985, %v1126
    %1128 = vmatmul.bf16.gmra.mxu0 %v965
    %v1129 = vpop.f32.mrf.mxu0
    %v1130 = vadd.f32 %v985, %v1129
    %v1131 = vpop.f32.mrf.mxu0
    %v1132 = vadd.f32 %v985, %v1131
    %1133 = vmatmul.bf16.gmra.mxu0 %v966
    %v1134 = vpop.f32.mrf.mxu0
    %v1135 = vadd.f32 %v985, %v1134
    %v1136 = vpop.f32.mrf.mxu0
    %v1137 = vadd.f32 %v985, %v1136
    %1138 = vdwg.mxu0
    %v1139 = vsub.f32 0.0, %v1045
    %v1140 = vsub.f32 0.0, %v1047
    %v1141 = vsub.f32 0.0, %v1050
    %v1142 = vsub.f32 0.0, %v1052
    %v1143 = vsub.f32 0.0, %v1055
    %v1144 = vsub.f32 0.0, %v1057
    %v1145 = vsub.f32 0.0, %v1060
    %v1146 = vsub.f32 0.0, %v1062
    %v1147 = vsub.f32 0.0, %v1065
    %v1148 = vsub.f32 0.0, %v1067
    %v1149 = vsub.f32 0.0, %v1070
    %v1150 = vsub.f32 0.0, %v1072
    %v1151 = vsub.f32 0.0, %v1075
    %v1152 = vsub.f32 0.0, %v1077
    %v1153 = vsub.f32 0.0, %v1080
    %v1154 = vsub.f32 0.0, %v1082
    %v1155 = vsub.f32 0.0, %v1085
    %v1156 = vsub.f32 0.0, %v1087
    %v1157 = vsub.f32 0.0, %v1090
    %v1158 = vsub.f32 0.0, %v1092
    %v1159 = vsub.f32 0.0, %v1095
    %v1160 = vsub.f32 0.0, %v1097
    %v1161 = vsub.f32 0.0, %v1100
    %v1162 = vsub.f32 0.0, %v1102
    %v1163 = vsub.f32 0.0, %v1105
    %v1164 = vsub.f32 0.0, %v1107
    %v1165 = vsub.f32 0.0, %v1110
    %v1166 = vsub.f32 0.0, %v1112
    %v1167 = vsub.f32 0.0, %v1115
    %v1168 = vsub.f32 0.0, %v1117
    %v1169 = vsub.f32 0.0, %v1120
    %v1170 = vsub.f32 0.0, %v1122
    %v1171 = vsub.f32 0.0, %v1125
    %v1172 = vsub.f32 0.0, %v1127
    %v1173 = vsub.f32 0.0, %v1130
    %v1174 = vsub.f32 0.0, %v1132
    %v1175 = vsub.f32 0.0, %v1135
    %v1176 = vsub.f32 0.0, %v1137
    %v1177 = vmul.f32 %v1139, 1.442695
    %v1178 = vpow.pop %v1177
    %v1179 = vmul.f32 %v1140, 1.442695
    %v1180 = vpow.pop %v1179
    %v1181 = vmul.f32 %v1141, 1.442695
    %v1182 = vpow.pop %v1181
    %v1183 = vmul.f32 %v1142, 1.442695
    %v1184 = vpow.pop %v1183
    %v1185 = vmul.f32 %v1143, 1.442695
    %v1186 = vpow.pop %v1185
    %v1187 = vmul.f32 %v1144, 1.442695
    %v1188 = vpow.pop %v1187
    %v1189 = vmul.f32 %v1145, 1.442695
    %v1190 = vpow.pop %v1189
    %v1191 = vmul.f32 %v1146, 1.442695
    %v1192 = vpow.pop %v1191
    %v1193 = vmul.f32 %v1147, 1.442695
    %v1194 = vpow.pop %v1193
    %v1195 = vmul.f32 %v1148, 1.442695
    %v1196 = vpow.pop %v1195
    %v1197 = vmul.f32 %v1149, 1.442695
    %v1198 = vpow.pop %v1197
    %v1199 = vmul.f32 %v1150, 1.442695
    %v1200 = vpow.pop %v1199
    %v1201 = vmul.f32 %v1151, 1.442695
    %v1202 = vpow.pop %v1201
    %v1203 = vmul.f32 %v1152, 1.442695
    %v1204 = vpow.pop %v1203
    %v1205 = vmul.f32 %v1153, 1.442695
    %v1206 = vpow.pop %v1205
    %v1207 = vmul.f32 %v1154, 1.442695
    %v1208 = vpow.pop %v1207
    %v1209 = vmul.f32 %v1155, 1.442695
    %v1210 = vpow.pop %v1209
    %v1211 = vmul.f32 %v1156, 1.442695
    %v1212 = vpow.pop %v1211
    %v1213 = vmul.f32 %v1157, 1.442695
    %v1214 = vpow.pop %v1213
    %v1215 = vmul.f32 %v1158, 1.442695
    %v1216 = vpow.pop %v1215
    %v1217 = vmul.f32 %v1159, 1.442695
    %v1218 = vpow.pop %v1217
    %v1219 = vmul.f32 %v1160, 1.442695
    %v1220 = vpow.pop %v1219
    %v1221 = vmul.f32 %v1161, 1.442695
    %v1222 = vpow.pop %v1221
    %v1223 = vmul.f32 %v1162, 1.442695
    %v1224 = vpow.pop %v1223
    %v1225 = vmul.f32 %v1163, 1.442695
    %v1226 = vpow.pop %v1225
    %v1227 = vmul.f32 %v1164, 1.442695
    %v1228 = vpow.pop %v1227
    %v1229 = vmul.f32 %v1165, 1.442695
    %v1230 = vpow.pop %v1229
    %v1231 = vmul.f32 %v1166, 1.442695
    %v1232 = vpow.pop %v1231
    %v1233 = vmul.f32 %v1167, 1.442695
    %v1234 = vpow.pop %v1233
    %v1235 = vmul.f32 %v1168, 1.442695
    %v1236 = vpow.pop %v1235
    %v1237 = vmul.f32 %v1169, 1.442695
    %v1238 = vpow.pop %v1237
    %v1239 = vmul.f32 %v1170, 1.442695
    %v1240 = vpow.pop %v1239
    %v1241 = vmul.f32 %v1171, 1.442695
    %v1242 = vpow.pop %v1241
    %v1243 = vmul.f32 %v1172, 1.442695
    %v1244 = vpow.pop %v1243
    %v1245 = vmul.f32 %v1173, 1.442695
    %v1246 = vpow.pop %v1245
    %v1247 = vmul.f32 %v1174, 1.442695
    %v1248 = vpow.pop %v1247
    %v1249 = vmul.f32 %v1175, 1.442695
    %v1250 = vpow.pop %v1249
    %v1251 = vmul.f32 %v1176, 1.442695
    %v1252 = vpow.pop %v1251
    %v1253 = vadd.f32 %v1178, 1.0
    %v1254 = vadd.f32 %v1180, 1.0
    %v1255 = vadd.f32 %v1182, 1.0
    %v1256 = vadd.f32 %v1184, 1.0
    %v1257 = vadd.f32 %v1186, 1.0
    %v1258 = vadd.f32 %v1188, 1.0
    %v1259 = vadd.f32 %v1190, 1.0
    %v1260 = vadd.f32 %v1192, 1.0
    %v1261 = vadd.f32 %v1194, 1.0
    %v1262 = vadd.f32 %v1196, 1.0
    %v1263 = vadd.f32 %v1198, 1.0
    %v1264 = vadd.f32 %v1200, 1.0
    %v1265 = vadd.f32 %v1202, 1.0
    %v1266 = vadd.f32 %v1204, 1.0
    %v1267 = vadd.f32 %v1206, 1.0
    %v1268 = vadd.f32 %v1208, 1.0
    %v1269 = vadd.f32 %v1210, 1.0
    %v1270 = vadd.f32 %v1212, 1.0
    %v1271 = vadd.f32 %v1214, 1.0
    %v1272 = vadd.f32 %v1216, 1.0
    %v1273 = vadd.f32 %v1218, 1.0
    %v1274 = vadd.f32 %v1220, 1.0
    %v1275 = vadd.f32 %v1222, 1.0
    %v1276 = vadd.f32 %v1224, 1.0
    %v1277 = vadd.f32 %v1226, 1.0
    %v1278 = vadd.f32 %v1228, 1.0
    %v1279 = vadd.f32 %v1230, 1.0
    %v1280 = vadd.f32 %v1232, 1.0
    %v1281 = vadd.f32 %v1234, 1.0
    %v1282 = vadd.f32 %v1236, 1.0
    %v1283 = vadd.f32 %v1238, 1.0
    %v1284 = vadd.f32 %v1240, 1.0
    %v1285 = vadd.f32 %v1242, 1.0
    %v1286 = vadd.f32 %v1244, 1.0
    %v1287 = vadd.f32 %v1246, 1.0
    %v1288 = vadd.f32 %v1248, 1.0
    %v1289 = vadd.f32 %v1250, 1.0
    %v1290 = vadd.f32 %v1252, 1.0
    %v1291 = vrcp.pop %v1253
    %v1292 = vrcp.pop %v1254
    %v1293 = vrcp.pop %v1255
    %v1294 = vrcp.pop %v1256
    %v1295 = vrcp.pop %v1257
    %v1296 = vrcp.pop %v1258
    %v1297 = vrcp.pop %v1259
    %v1298 = vrcp.pop %v1260
    %v1299 = vrcp.pop %v1261
    %v1300 = vrcp.pop %v1262
    %v1301 = vrcp.pop %v1263
    %v1302 = vrcp.pop %v1264
    %v1303 = vrcp.pop %v1265
    %v1304 = vrcp.pop %v1266
    %v1305 = vrcp.pop %v1267
    %v1306 = vrcp.pop %v1268
    %v1307 = vrcp.pop %v1269
    %v1308 = vrcp.pop %v1270
    %v1309 = vrcp.pop %v1271
    %v1310 = vrcp.pop %v1272
    %v1311 = vrcp.pop %v1273
    %v1312 = vrcp.pop %v1274
    %v1313 = vrcp.pop %v1275
    %v1314 = vrcp.pop %v1276
    %v1315 = vrcp.pop %v1277
    %v1316 = vrcp.pop %v1278
    %v1317 = vrcp.pop %v1279
    %v1318 = vrcp.pop %v1280
    %v1319 = vrcp.pop %v1281
    %v1320 = vrcp.pop %v1282
    %v1321 = vrcp.pop %v1283
    %v1322 = vrcp.pop %v1284
    %v1323 = vrcp.pop %v1285
    %v1324 = vrcp.pop %v1286
    %v1325 = vrcp.pop %v1287
    %v1326 = vrcp.pop %v1288
    %v1327 = vrcp.pop %v1289
    %v1328 = vrcp.pop %v1290
    %v1329 = vpack.c.bf16 %v1291, %v1291
    %v1330 = vpack.c.bf16 %v1292, %v1292
    %v1331 = vpack.c.bf16 %v1293, %v1293
    %v1332 = vpack.c.bf16 %v1294, %v1294
    %v1333 = vpack.c.bf16 %v1295, %v1295
    %v1334 = vpack.c.bf16 %v1296, %v1296
    %v1335 = vpack.c.bf16 %v1297, %v1297
    %v1336 = vpack.c.bf16 %v1298, %v1298
    %v1337 = vpack.c.bf16 %v1299, %v1299
    %v1338 = vpack.c.bf16 %v1300, %v1300
    %v1339 = vpack.c.bf16 %v1301, %v1301
    %v1340 = vpack.c.bf16 %v1302, %v1302
    %v1341 = vpack.c.bf16 %v1303, %v1303
    %v1342 = vpack.c.bf16 %v1304, %v1304
    %v1343 = vpack.c.bf16 %v1305, %v1305
    %v1344 = vpack.c.bf16 %v1306, %v1306
    %v1345 = vpack.c.bf16 %v1307, %v1307
    %v1346 = vpack.c.bf16 %v1308, %v1308
    %v1347 = vpack.c.bf16 %v1309, %v1309
    %v1348 = vpack.c.bf16 %v1310, %v1310
    %v1349 = vpack.c.bf16 %v1311, %v1311
    %v1350 = vpack.c.bf16 %v1312, %v1312
    %v1351 = vpack.c.bf16 %v1313, %v1313
    %v1352 = vpack.c.bf16 %v1314, %v1314
    %v1353 = vpack.c.bf16 %v1315, %v1315
    %v1354 = vpack.c.bf16 %v1316, %v1316
    %v1355 = vpack.c.bf16 %v1317, %v1317
    %v1356 = vpack.c.bf16 %v1318, %v1318
    %v1357 = vpack.c.bf16 %v1319, %v1319
    %v1358 = vpack.c.bf16 %v1320, %v1320
    %v1359 = vpack.c.bf16 %v1321, %v1321
    %v1360 = vpack.c.bf16 %v1322, %v1322
    %v1361 = vpack.c.bf16 %v1323, %v1323
    %v1362 = vpack.c.bf16 %v1324, %v1324
    %v1363 = vpack.c.bf16 %v1325, %v1325
    %v1364 = vpack.c.bf16 %v1326, %v1326
    %v1365 = vpack.c.bf16 %v1327, %v1327
    %v1366 = vpack.c.bf16 %v1328, %v1328
    %1367 = vst [vmem:[#allocation2] sm:$0xf] %v1329
    %1368 = vst [vmem:[#allocation2 + $0x4] sm:$0xf] %v1330
    %1369 = vst [vmem:[#allocation2 + $0x8] sm:$0xf] %v1331
    %1370 = vst [vmem:[#allocation2 + $0xc] sm:$0xf] %v1332
    %1371 = vst [vmem:[#allocation2 + $0x10] sm:$0xf] %v1333
    %1372 = vst [vmem:[#allocation2 + $0x14] sm:$0xf] %v1334
    %1373 = vst [vmem:[#allocation2 + $0x18] sm:$0xf] %v1335
    %1374 = vst [vmem:[#allocation2 + $0x1c] sm:$0xf] %v1336
    %1375 = vst [vmem:[#allocation2 + $0x20] sm:$0xf] %v1337
    %1376 = vst [vmem:[#allocation2 + $0x24] sm:$0xf] %v1338
    %1377 = vst [vmem:[#allocation2 + $0x28] sm:$0xf] %v1339
    %1378 = vst [vmem:[#allocation2 + $0x2c] sm:$0xf] %v1340
    %1379 = vst [vmem:[#allocation2 + $0x30] sm:$0xf] %v1341
    %1380 = vst [vmem:[#allocation2 + $0x34] sm:$0xf] %v1342
    %1381 = vst [vmem:[#allocation2 + $0x38] sm:$0xf] %v1343
    %1382 = vst [vmem:[#allocation2 + $0x3c] sm:$0xf] %v1344
    %1383 = vst [vmem:[#allocation2 + $0x40] sm:$0xf] %v1345
    %1384 = vst [vmem:[#allocation2 + $0x44] sm:$0xf] %v1346
    %1385 = vst [vmem:[#allocation2 + $0x48] sm:$0xf] %v1347
    %1386 = vst [vmem:[#allocation2 + $0x4c] sm:$0xf] %v1348
    %1387 = vst [vmem:[#allocation2 + $0x50] sm:$0xf] %v1349
    %1388 = vst [vmem:[#allocation2 + $0x54] sm:$0xf] %v1350
    %1389 = vst [vmem:[#allocation2 + $0x58] sm:$0xf] %v1351
    %1390 = vst [vmem:[#allocation2 + $0x5c] sm:$0xf] %v1352
    %1391 = vst [vmem:[#allocation2 + $0x60] sm:$0xf] %v1353
    %1392 = vst [vmem:[#allocation2 + $0x64] sm:$0xf] %v1354
    %1393 = vst [vmem:[#allocation2 + $0x68] sm:$0xf] %v1355
    %1394 = vst [vmem:[#allocation2 + $0x6c] sm:$0xf] %v1356
    %1395 = vst [vmem:[#allocation2 + $0x70] sm:$0xf] %v1357
    %1396 = vst [vmem:[#allocation2 + $0x74] sm:$0xf] %v1358
    %1397 = vst [vmem:[#allocation2 + $0x78] sm:$0xf] %v1359
    %1398 = vst [vmem:[#allocation2 + $0x7c] sm:$0xf] %v1360
    %1399 = vst [vmem:[#allocation2 + $0x80] sm:$0xf] %v1361
    %1400 = vst [vmem:[#allocation2 + $0x84] sm:$0xf] %v1362
    %1401 = vst [vmem:[#allocation2 + $0x88] sm:$0xf] %v1363
    %1402 = vst [vmem:[#allocation2 + $0x8c] sm:$0xf] %v1364
    %1403 = vst [vmem:[#allocation2 + $0x90] sm:$0xf] %v1365
    %1404 = vst [vmem:[#allocation2 + $0x94] sm:$0xf] %v1366
    // Predicated region
    $region38: #{tpu_custom_call.1} parent=1 // pred_check
      _
    $region39: #{tpu_custom_call.1} parent=1 // pred_check_branch
      %1406 = sbr.rel (0) target = $region41
    $region40: #{tpu_custom_call.1} parent=1 // pred_region
      %1408 = vsyncadd [#allocation3], 0
      %s1409 = sshll.u32 [#allocation2], 4
      %s1410 = int_to_ptr.vmem [resolvable:$true] %s1409
      %s1411 = sshll.u32 %s9, 4
      %s1412 = int_to_ptr.hbm [resolvable:$true] %s1411
      %1417 = dma.vmem_to_hbm [thread:$0]  %s1410, 2432, %s1412, [#allocation3], 64, 64, 4
    $region41: #{tpu_custom_call.1} parent=1 // pred_fallthru
      _
    // Predicated region
    $region42: #{tpu_custom_call.1} parent=1 // pred_check
      _
    $region43: #{tpu_custom_call.1} parent=1 // pred_check_branch
      %1419 = sbr.rel (0) target = $region45
    $region44: #{tpu_custom_call.1} parent=1 // pred_region
      %1421 = vsyncadd [#allocation5], 0
      %s1422 = sshll.u32 [#allocation4], 4
      %s1423 = int_to_ptr.vmem [resolvable:$true] %s1422
      %s1424 = sshll.u32 %s10, 4
      %s1425 = int_to_ptr.hbm [resolvable:$true] %s1424
      %1430 = dma.vmem_to_hbm [thread:$0]  %s1423, 9728, %s1425, [#allocation5], 256, 256, 16
    $region45: #{tpu_custom_call.1} parent=1 // pred_fallthru
      _
    // Predicated region
    $region46: #{tpu_custom_call.1} parent=1 // pred_check
      _
    $region47: #{tpu_custom_call.1} parent=1 // pred_check_branch
      %1432 = sbr.rel (0) target = $region49
    $region48: #{tpu_custom_call.1} parent=1 // pred_region
      %1434 = dma.done [#allocation3], 2432
    $region49: #{tpu_custom_call.1} parent=1 // pred_fallthru
      _
    // Predicated region
    $region50: #{tpu_custom_call.1} parent=1 // pred_check
      _
    $region51: #{tpu_custom_call.1} parent=1 // pred_check_branch
      %1436 = sbr.rel (0) target = $region53
    $region52: #{tpu_custom_call.1} parent=1 // pred_region
      %1438 = dma.done [#allocation5], 9728
    $region53: #{tpu_custom_call.1} parent=1 // pred_fallthru
      _
    %1439 = vsyncpa [#allocation3], 1
    %1440 = vsyncpa [#allocation5], 1

</llo_original>
